<compile_context>
chip_gen: v7x
topology: tpu7x:2x2x1
jax: 0.10.0
libtpu: 0.0.40
codegen_flags: <defaults>
</compile_context>

<pallas_src>
import math
import functools

import jax
import jax.numpy as jnp
from jax.experimental import pallas as pl
from jax.experimental.pallas import tpu as pltpu

# F.rrelu with training=False (the module's usage) is deterministic:
# negative slope = (lower + upper) / 2 with defaults lower=1/8, upper=1/3.
_RRELU_SLOPE = (1.0 / 8.0 + 1.0 / 3.0) / 2.0


# ----------------------------------------------------------------------------
# VMEM budgeting / tile sizing (per-generation, conservative)
# ----------------------------------------------------------------------------
def _vmem_budget_bytes():
    """Scoped-VMEM budget: 3/4 of reported capacity, capped at 48 MiB so the limit is
    legal on every generation (v7x has only 64 MiB per TensorCore)."""
    try:
        cap = int(pltpu.get_tpu_info().vmem_capacity_bytes)
    except Exception:
        cap = 64 << 20  # most restrictive generation (v7x)
    return min((cap * 3) // 4, 48 << 20)


def _choose_col_tile(n, a_tile_budget_bytes):
    """Largest TN (multiple of 128 that divides n) whose double-buffered bf16 (n, TN)
    A^T block fits the budget; falls back to the full dimension when n isn't
    128-aligned (full-extent blocks are always legal)."""
    if n % 128 != 0:
        return n
    cands = [tn for tn in range(128, n + 1, 128) if n % tn == 0]
    fitting = [tn for tn in cands if 2 * n * tn * 2 <= a_tile_budget_bytes]
    return max(fitting) if fitting else min(cands)


# ----------------------------------------------------------------------------
# Kernel 1: serial mat_GRU_cell recurrence — evolves Q_t, writes the Q stack
# ----------------------------------------------------------------------------
def _evolve_q_kernel(ztk_ref, wurz_ref, wurq_ref, bur_ref,
                     whz_ref, whq_ref, bh_ref, q0_ref,
                     q_out_ref, q_scr, *, din):
    t = pl.program_id(0)

    # Initialize the carried GCN weights from GCN_init_weights at the first step.
    # (q0 stays VMEM-resident via a constant index_map; it is tiny — kept for clarity.)
    @pl.when(t == 0)
    def _():
        q_scr[...] = q0_ref[...]

    q = q_scr[...]                       # (Din, Dout) f32, carried across timesteps
    q_bf = q.astype(jnp.bfloat16)
    ztk = ztk_ref[0]                     # (Din, Dout) bf16  (precomputed z_topk)

    # update + reset gates (no in-kernel concatenation: two dots + VPU add)
    #   [Wu;Wr] @ z_topk + [Uu;Ur] @ Q + [bu;br]
    ur = jax.nn.sigmoid(
        jnp.dot(wurz_ref[...], ztk, preferred_element_type=jnp.float32)
        + jnp.dot(wurq_ref[...], q_bf, preferred_element_type=jnp.float32)
        + bur_ref[...])                  # (2Din, Dout) f32
    update = ur[:din]                    # (Din, Dout)
    reset = ur[din:]                     # (Din, Dout)

    # htilda:  Wh @ z_topk + Uh @ (reset * Q) + bh
    h_cap = jnp.tanh(
        jnp.dot(whz_ref[...], ztk, preferred_element_type=jnp.float32)
        + jnp.dot(whq_ref[...], (reset * q).astype(jnp.bfloat16),
                  preferred_element_type=jnp.float32)
        + bh_ref[...])                   # (Din, Dout) f32

    q_new = (1.0 - update) * q + update * h_cap
    q_scr[...] = q_new                               # keep the carried state in f32
    q_out_ref[0] = q_new.astype(jnp.bfloat16)        # bf16 stack for the GCN kernel


def _evolve_q_call(z_topk, W_ur_z, W_ur_q, b_ur, W_h_z, W_h_q, b_h, gcn_init):
    T, Din, Dout = z_topk.shape
    kern = functools.partial(_evolve_q_kernel, din=Din)

    def const2d(shape):
        # Same block every grid step -> stays VMEM-resident across the whole sequence.
        return pl.BlockSpec(shape, lambda t: (0, 0))

    return pl.pallas_call(
        kern,
        grid=(T,),
        in_specs=[
            pl.BlockSpec((1, Din, Dout), lambda t: (t, 0, 0)),   # z_topk_t (bf16)
            const2d((2 * Din, Din)),                             # [Wu;Wr]  (bf16)
            const2d((2 * Din, Din)),                             # [Uu;Ur]  (bf16)
            const2d((2 * Din, Dout)),                            # [bu;br]  (f32)
            const2d((Din, Din)),                                 # Wh       (bf16)
            const2d((Din, Din)),                                 # Uh       (bf16)
            const2d((Din, Dout)),                                # bh       (f32)
            const2d((Din, Dout)),                                # GCN_init (f32)
        ],
        out_specs=pl.BlockSpec((1, Din, Dout), lambda t: (t, 0, 0)),
        out_shape=jax.ShapeDtypeStruct((T, Din, Dout), jnp.bfloat16),
        scratch_shapes=[pltpu.VMEM((Din, Dout), jnp.float32)],   # carried GCN weights
        compiler_params=pltpu.CompilerParams(
            dimension_semantics=("arbitrary",)),                 # time recurrence
    )(z_topk, W_ur_z, W_ur_q, b_ur, W_h_z, W_h_q, b_h, gcn_init)


# ----------------------------------------------------------------------------
# Kernel 2: GCN step  rrelu(Ahat_t @ (Z_t @ Q_t)), computed transposed (lane = N)
# ----------------------------------------------------------------------------
def _gcn_kernel(zT_ref, qT_ref, aT_ref, out_ref):
    # out^T[:, cols] = (Q^T @ Z^T) @ A^T[:, cols]     (all bf16 operands, f32 acc)
    zw_T = jnp.dot(qT_ref[0], zT_ref[0],
                   preferred_element_type=jnp.float32)           # (Dout, N)
    y = jnp.dot(zw_T.astype(jnp.bfloat16), aT_ref[0],
                preferred_element_type=jnp.float32)              # (Dout, TN)
    out_ref[0] = jnp.where(y >= 0.0, y, y * _RRELU_SLOPE).astype(out_ref.dtype)


def _gcn_call(Z_T, qT_stack, A_T):
    T, Din, N = Z_T.shape
    Dout = qT_stack.shape[1]

    vmem_limit = _vmem_budget_bytes()
    # Double-buffered bf16 A^T tile gets ~half the budget (rest: Z^T block, out, Q).
    TN = _choose_col_tile(N, vmem_limit // 2)

    return pl.pallas_call(
        _gcn_kernel,
        grid=(T, N // TN),
        in_specs=[
            pl.BlockSpec((1, Din, N), lambda t, j: (t, 0, 0)),     # Z_t^T     (bf16)
            pl.BlockSpec((1, Dout, Din), lambda t, j: (t, 0, 0)),  # Q_t^T     (bf16)
            pl.BlockSpec((1, N, TN), lambda t, j: (t, 0, j)),      # A_t^T col (bf16)
        ],
        out_specs=pl.BlockSpec((1, Dout, TN), lambda t, j: (t, 0, j)),
        out_shape=jax.ShapeDtypeStruct((T, Dout, N), jnp.bfloat16),  # bf16 writeback
        compiler_params=pltpu.CompilerParams(
            dimension_semantics=("parallel", "parallel"),          # megacore-shardable
            vmem_limit_bytes=vmem_limit),
    )(Z_T, qT_stack, A_T)


# ----------------------------------------------------------------------------
# GRCU forward (EGCNH): batched top-k precompute + recurrence kernel + GCN kernel
# ----------------------------------------------------------------------------
@jax.jit
def _grcu_core(A_stack, Z_stack, params):
    Din, Dout = params["gcn_init"].shape
    k = Dout  # TopK's k == output_dim

    # --- choose_topk for ALL timesteps at once (depends only on the inputs) ---
    scorer = params["scorer"]                                     # (Din, 1)
    scorer_n = scorer * jax.lax.rsqrt(jnp.sum(scorer * scorer))   # norm hoisted out
    scores = (Z_stack @ scorer_n)[..., 0]                         # (T, N), lane-dense
    # mask is None -> zero mask; all scores finite, so no -inf filtering / padding.
    vals, idx = jax.lax.top_k(scores, k)                          # (T, k)
    z_rows = jnp.take_along_axis(Z_stack, idx[..., None], axis=1)            # (T, k, Din)
    z_topk = jnp.swapaxes(z_rows * jnp.tanh(vals)[..., None], 1, 2)          # (T, Din, k)
    z_topk = z_topk.astype(jnp.bfloat16)

    # --- pre-split GRU gate parameters (built once, constant over T) ---
    W_ur_z = jnp.concatenate([params["Wu"], params["Wr"]], axis=0).astype(jnp.bfloat16)
    W_ur_q = jnp.concatenate([params["Uu"], params["Ur"]], axis=0).astype(jnp.bfloat16)
    b_ur = jnp.concatenate([params["bu"], params["br"]], axis=0)   # f32
    W_h_z = params["Wh"].astype(jnp.bfloat16)
    W_h_q = params["Uh"].astype(jnp.bfloat16)

    # --- kernel 1: serial weight evolution (tiny, 'arbitrary' time axis) ---
    q_stack = _evolve_q_call(z_topk, W_ur_z, W_ur_q, b_ur,
                             W_h_z, W_h_q, params["bh"],
                             params["gcn_init"])                  # (T, Din, Dout) bf16
    qT_stack = jnp.swapaxes(q_stack, 1, 2)                        # (T, Dout, Din) bf16

    # --- kernel 2: parallel GCN step over (T, column tiles), lane-dense output ---
    A_T = jnp.swapaxes(A_stack, 1, 2).astype(jnp.bfloat16)        # (T, N, N)  = Ahat^T
    Z_T = jnp.swapaxes(Z_stack, 1, 2).astype(jnp.bfloat16)        # (T, Din, N)
    out_T = _gcn_call(Z_T, qT_stack, A_T)                         # (T, Dout, N) bf16

    # Transpose back for callers; f32 to match the module's output interface.
    return jnp.swapaxes(out_T, 1, 2).astype(jnp.float32)          # (T, N, Dout)


def grcu_forward(A_list, node_embs_list, params):
    """Matches GRCU.forward with egcn_type='EGCNH' and mask_list=None."""
    A_stack = jnp.stack(A_list)              # (T, N, N)
    Z_stack = jnp.stack(node_embs_list)      # (T, N, Din)
    out = _grcu_core(A_stack, Z_stack, params)   # (T, N, Dout)
    return [out[t] for t in range(out.shape[0])]


# ----------------------------------------------------------------------------
# Deterministic parameter init (mirrors the PyTorch reset_param uniforms)
# ----------------------------------------------------------------------------
def init_params(key, input_dim, output_dim):
    def uni(k, shape, stdv):
        return jax.random.uniform(k, shape, jnp.float32, -stdv, stdv)

    ks = jax.random.split(key, 11)
    sd_in = 1.0 / math.sqrt(input_dim)
    sd_out = 1.0 / math.sqrt(output_dim)
    return {
        # TopK scorer: stdv = 1/sqrt(feats)
        "scorer": uni(ks[0], (input_dim, 1), sd_in),
        # update gate
        "Wu": uni(ks[1], (input_dim, input_dim), sd_in),
        "Uu": uni(ks[2], (input_dim, input_dim), sd_in),
        "bu": uni(ks[3], (input_dim, output_dim), sd_out),
        # reset gate
        "Wr": uni(ks[4], (input_dim, input_dim), sd_in),
        "Ur": uni(ks[5], (input_dim, input_dim), sd_in),
        "br": uni(ks[6], (input_dim, output_dim), sd_out),
        # htilda gate
        "Wh": uni(ks[7], (input_dim, input_dim), sd_in),
        "Uh": uni(ks[8], (input_dim, input_dim), sd_in),
        "bh": uni(ks[9], (input_dim, output_dim), sd_out),
        # GCN init weights
        "gcn_init": uni(ks[10], (input_dim, output_dim), sd_out),
    }


if __name__ == "__main__":
    N, INPUT_DIM, OUTPUT_DIM, T = 64, 32, 16, 3

    key = jax.random.PRNGKey(0)
    k_params, k_a, k_z = jax.random.split(key, 3)
    params = init_params(k_params, INPUT_DIM, OUTPUT_DIM)

    ka = jax.random.split(k_a, T)
    kz = jax.random.split(k_z, T)
    # Symmetric, row-normalized-ish adjacency surrogates (dense Ahat).
    A_list = []
    for t in range(T):
        a = jax.random.uniform(ka[t], (N, N), jnp.float32)
        a = (a + a.T) * 0.5 / N
        A_list.append(a)
    node_embs_list = [jax.random.normal(kz[t], (N, INPUT_DIM), jnp.float32)
                      for t in range(T)]

    out_seq = grcu_forward(A_list, node_embs_list, params)
    for o in out_seq:
        jax.block_until_ready(o)
        assert o.shape == (N, OUTPUT_DIM)
        assert bool(jnp.all(jnp.isfinite(o)))
    print("KERNEL_OK")
</pallas_src>

<mosaic_0001>
module attributes {stable_mosaic.version = 11 : i64} {
  func.func @_evolve_q_kernel(%arg0: i32, %arg1: memref<1x32x16xbf16, #tpu.memory_space<vmem>>, %arg2: memref<64x32xbf16, #tpu.memory_space<vmem>>, %arg3: memref<64x32xbf16, #tpu.memory_space<vmem>>, %arg4: memref<64x16xf32, #tpu.memory_space<vmem>>, %arg5: memref<32x32xbf16, #tpu.memory_space<vmem>>, %arg6: memref<32x32xbf16, #tpu.memory_space<vmem>>, %arg7: memref<32x16xf32, #tpu.memory_space<vmem>>, %arg8: memref<32x16xf32, #tpu.memory_space<vmem>>, %arg9: memref<1x32x16xbf16, #tpu.memory_space<vmem>>, %arg10: memref<32x16xf32, #tpu.memory_space<vmem>>) attributes {dimension_semantics = [#tpu.dimension_semantics<arbitrary>], iteration_bounds = array<i64: 3>, scalar_prefetch = 0 : i64, scratch_operands = 1 : i64, tpu.core_type = #tpu.core_type<tc>, window_params = [{transform_indices = @transform_0, window_bounds = array<i64: 1, 32, 16>}, {pipeline_mode = #tpu.pipeline_mode<synchronous>, transform_indices = @transform_1, window_bounds = array<i64: 64, 32>}, {pipeline_mode = #tpu.pipeline_mode<synchronous>, transform_indices = @transform_2, window_bounds = array<i64: 64, 32>}, {pipeline_mode = #tpu.pipeline_mode<synchronous>, transform_indices = @transform_3, window_bounds = array<i64: 64, 16>}, {pipeline_mode = #tpu.pipeline_mode<synchronous>, transform_indices = @transform_4, window_bounds = array<i64: 32, 32>}, {pipeline_mode = #tpu.pipeline_mode<synchronous>, transform_indices = @transform_5, window_bounds = array<i64: 32, 32>}, {pipeline_mode = #tpu.pipeline_mode<synchronous>, transform_indices = @transform_6, window_bounds = array<i64: 32, 16>}, {pipeline_mode = #tpu.pipeline_mode<synchronous>, transform_indices = @transform_7, window_bounds = array<i64: 32, 16>}, {transform_indices = @transform_8, window_bounds = array<i64: 1, 32, 16>}]} {
    %c0_i32 = arith.constant 0 : i32
    %0 = arith.cmpi eq, %arg0, %c0_i32 : i32
    %1 = arith.extui %0 : i1 to i32
    %c0_i32_0 = arith.constant 0 : i32
    %2 = arith.cmpi ne, %1, %c0_i32_0 : i32
    scf.if %2 {
      %c0_27 = arith.constant 0 : index
      %c0_28 = arith.constant 0 : index
      %41 = vector.load %arg8[%c0_27, %c0_28] : memref<32x16xf32, #tpu.memory_space<vmem>>, vector<32x16xf32>
      %c0_29 = arith.constant 0 : index
      %c0_30 = arith.constant 0 : index
      %42 = vector.load %arg10[%c0_29, %c0_30] : memref<32x16xf32, #tpu.memory_space<vmem>>, vector<32x16xf32>
      tpu.vector_store %arg10[%c0_29, %c0_30], %41 {strides = array<i32>} : memref<32x16xf32, #tpu.memory_space<vmem>>, vector<32x16xf32>,
    } else {
    }
    %c0 = arith.constant 0 : index
    %c0_1 = arith.constant 0 : index
    %3 = vector.load %arg10[%c0, %c0_1] : memref<32x16xf32, #tpu.memory_space<vmem>>, vector<32x16xf32>
    %4 = arith.truncf %3 : vector<32x16xf32> to vector<32x16xbf16>
    %c0_2 = arith.constant 0 : index
    %c0_3 = arith.constant 0 : index
    %c0_4 = arith.constant 0 : index
    %5 = vector.load %arg1[%c0_2, %c0_3, %c0_4] : memref<1x32x16xbf16, #tpu.memory_space<vmem>>, vector<1x32x16xbf16>
    %6 = vector.shape_cast %5 : vector<1x32x16xbf16> to vector<32x16xbf16>
    %c0_5 = arith.constant 0 : index
    %c0_6 = arith.constant 0 : index
    %7 = vector.load %arg2[%c0_5, %c0_6] : memref<64x32xbf16, #tpu.memory_space<vmem>>, vector<64x32xbf16>
    %cst = arith.constant dense<0.000000e+00> : vector<64x16xf32>
    %8 = tpu.matmul %7, %6, %cst {dimension_numbers = #tpu.dot_dimension_numbers<[1], [0], [0], [1], [0, 0, 1, 1], [], []>} : vector<64x32xbf16>, vector<32x16xbf16>, vector<64x16xf32> -> vector<64x16xf32>
    %c0_7 = arith.constant 0 : index
    %c0_8 = arith.constant 0 : index
    %9 = vector.load %arg3[%c0_7, %c0_8] : memref<64x32xbf16, #tpu.memory_space<vmem>>, vector<64x32xbf16>
    %cst_9 = arith.constant dense<0.000000e+00> : vector<64x16xf32>
    %10 = tpu.matmul %9, %4, %cst_9 {dimension_numbers = #tpu.dot_dimension_numbers<[1], [0], [0], [1], [0, 0, 1, 1], [], []>} : vector<64x32xbf16>, vector<32x16xbf16>, vector<64x16xf32> -> vector<64x16xf32>
    %11 = arith.addf %8, %10 : vector<64x16xf32>
    %c0_10 = arith.constant 0 : index
    %c0_11 = arith.constant 0 : index
    %12 = vector.load %arg4[%c0_10, %c0_11] : memref<64x16xf32, #tpu.memory_space<vmem>>, vector<64x16xf32>
    %13 = arith.addf %11, %12 : vector<64x16xf32>
    %14 = arith.negf %13 : vector<64x16xf32>
    %15 = math.exp %14 : vector<64x16xf32>
    %cst_12 = arith.constant 1.000000e+00 : f32
    %16 = vector.broadcast %cst_12 : f32 to vector<64x16xf32>
    %17 = arith.addf %16, %15 : vector<64x16xf32>
    %18 = arith.divf %16, %17 : vector<64x16xf32>
    %19 = vector.extract_strided_slice %18 {offsets = [0, 0], sizes = [32, 16], strides = [1, 1]} : vector<64x16xf32> to vector<32x16xf32>
    %20 = vector.extract_strided_slice %18 {offsets = [32, 0], sizes = [32, 16], strides = [1, 1]} : vector<64x16xf32> to vector<32x16xf32>
    %c0_13 = arith.constant 0 : index
    %c0_14 = arith.constant 0 : index
    %21 = vector.load %arg5[%c0_13, %c0_14] : memref<32x32xbf16, #tpu.memory_space<vmem>>, vector<32x32xbf16>
    %cst_15 = arith.constant dense<0.000000e+00> : vector<32x16xf32>
    %22 = tpu.matmul %21, %6, %cst_15 {dimension_numbers = #tpu.dot_dimension_numbers<[1], [0], [0], [1], [0, 0, 1, 1], [], []>} : vector<32x32xbf16>, vector<32x16xbf16>, vector<32x16xf32> -> vector<32x16xf32>
    %c0_16 = arith.constant 0 : index
    %c0_17 = arith.constant 0 : index
    %23 = vector.load %arg6[%c0_16, %c0_17] : memref<32x32xbf16, #tpu.memory_space<vmem>>, vector<32x32xbf16>
    %24 = arith.mulf %20, %3 : vector<32x16xf32>
    %25 = arith.truncf %24 : vector<32x16xf32> to vector<32x16xbf16>
    %cst_18 = arith.constant dense<0.000000e+00> : vector<32x16xf32>
    %26 = tpu.matmul %23, %25, %cst_18 {dimension_numbers = #tpu.dot_dimension_numbers<[1], [0], [0], [1], [0, 0, 1, 1], [], []>} : vector<32x32xbf16>, vector<32x16xbf16>, vector<32x16xf32> -> vector<32x16xf32>
    %27 = arith.addf %22, %26 : vector<32x16xf32>
    %c0_19 = arith.constant 0 : index
    %c0_20 = arith.constant 0 : index
    %28 = vector.load %arg7[%c0_19, %c0_20] : memref<32x16xf32, #tpu.memory_space<vmem>>, vector<32x16xf32>
    %29 = arith.addf %27, %28 : vector<32x16xf32>
    %30 = math.tanh %29 : vector<32x16xf32>
    %cst_21 = arith.constant 1.000000e+00 : f32
    %31 = vector.broadcast %cst_21 : f32 to vector<32x16xf32>
    %32 = arith.subf %31, %19 : vector<32x16xf32>
    %33 = arith.mulf %32, %3 : vector<32x16xf32>
    %34 = arith.mulf %19, %30 : vector<32x16xf32>
    %35 = arith.addf %33, %34 : vector<32x16xf32>
    %c0_22 = arith.constant 0 : index
    %c0_23 = arith.constant 0 : index
    %36 = vector.load %arg10[%c0_22, %c0_23] : memref<32x16xf32, #tpu.memory_space<vmem>>, vector<32x16xf32>
    tpu.vector_store %arg10[%c0_22, %c0_23], %35 {strides = array<i32>} : memref<32x16xf32, #tpu.memory_space<vmem>>, vector<32x16xf32>,
    %37 = arith.truncf %35 : vector<32x16xf32> to vector<32x16xbf16>
    %c0_24 = arith.constant 0 : index
    %c0_25 = arith.constant 0 : index
    %c0_26 = arith.constant 0 : index
    %38 = vector.load %arg9[%c0_24, %c0_25, %c0_26] : memref<1x32x16xbf16, #tpu.memory_space<vmem>>, vector<1x32x16xbf16>
    %39 = vector.shape_cast %38 : vector<1x32x16xbf16> to vector<32x16xbf16>
    %40 = vector.shape_cast %37 : vector<32x16xbf16> to vector<1x32x16xbf16>
    tpu.vector_store %arg9[%c0_24, %c0_25, %c0_26], %40 {strides = array<i32>} : memref<1x32x16xbf16, #tpu.memory_space<vmem>>, vector<1x32x16xbf16>,
    return
  }
  func.func @transform_0(%arg0: i32) -> (i32, i32, i32) {
    %c0_i32 = arith.constant 0 : i32
    %c0_i32_0 = arith.constant 0 : i32
    %c0_i32_1 = arith.constant 0 : i32
    return %arg0, %c0_i32, %c0_i32_0 : i32, i32, i32
  }
  func.func @transform_1(%arg0: i32) -> (i32, i32) {
    %c0_i32 = arith.constant 0 : i32
    %c0_i32_0 = arith.constant 0 : i32
    %c0_i32_1 = arith.constant 0 : i32
    return %c0_i32, %c0_i32_0 : i32, i32
  }
  func.func @transform_2(%arg0: i32) -> (i32, i32) {
    %c0_i32 = arith.constant 0 : i32
    %c0_i32_0 = arith.constant 0 : i32
    %c0_i32_1 = arith.constant 0 : i32
    return %c0_i32, %c0_i32_0 : i32, i32
  }
  func.func @transform_3(%arg0: i32) -> (i32, i32) {
    %c0_i32 = arith.constant 0 : i32
    %c0_i32_0 = arith.constant 0 : i32
    %c0_i32_1 = arith.constant 0 : i32
    return %c0_i32, %c0_i32_0 : i32, i32
  }
  func.func @transform_4(%arg0: i32) -> (i32, i32) {
    %c0_i32 = arith.constant 0 : i32
    %c0_i32_0 = arith.constant 0 : i32
    %c0_i32_1 = arith.constant 0 : i32
    return %c0_i32, %c0_i32_0 : i32, i32
  }
  func.func @transform_5(%arg0: i32) -> (i32, i32) {
    %c0_i32 = arith.constant 0 : i32
    %c0_i32_0 = arith.constant 0 : i32
    %c0_i32_1 = arith.constant 0 : i32
    return %c0_i32, %c0_i32_0 : i32, i32
  }
  func.func @transform_6(%arg0: i32) -> (i32, i32) {
    %c0_i32 = arith.constant 0 : i32
    %c0_i32_0 = arith.constant 0 : i32
    %c0_i32_1 = arith.constant 0 : i32
    return %c0_i32, %c0_i32_0 : i32, i32
  }
  func.func @transform_7(%arg0: i32) -> (i32, i32) {
    %c0_i32 = arith.constant 0 : i32
    %c0_i32_0 = arith.constant 0 : i32
    %c0_i32_1 = arith.constant 0 : i32
    return %c0_i32, %c0_i32_0 : i32, i32
  }
  func.func @transform_8(%arg0: i32) -> (i32, i32, i32) {
    %c0_i32 = arith.constant 0 : i32
    %c0_i32_0 = arith.constant 0 : i32
    %c0_i32_1 = arith.constant 0 : i32
    return %arg0, %c0_i32, %c0_i32_0 : i32, i32, i32
  }
}

module attributes {stable_mosaic.version = 11 : i64} {
  func.func @_gcn_kernel(%arg0: i32, %arg1: i32, %arg2: memref<1x32x64xbf16, #tpu.memory_space<vmem>>, %arg3: memref<1x16x32xbf16, #tpu.memory_space<vmem>>, %arg4: memref<1x64x64xbf16, #tpu.memory_space<vmem>>, %arg5: memref<1x16x64xbf16, #tpu.memory_space<vmem>>) attributes {dimension_semantics = [#tpu.dimension_semantics<parallel>, #tpu.dimension_semantics<parallel>], iteration_bounds = array<i64: 3, 1>, scalar_prefetch = 0 : i64, scratch_operands = 0 : i64, tpu.core_type = #tpu.core_type<tc>, window_params = [{transform_indices = @transform_0, window_bounds = array<i64: 1, 32, 64>}, {transform_indices = @transform_1, window_bounds = array<i64: 1, 16, 32>}, {transform_indices = @transform_2, window_bounds = array<i64: 1, 64, 64>}, {transform_indices = @transform_3, window_bounds = array<i64: 1, 16, 64>}]} {
    %c0 = arith.constant 0 : index
    %c0_0 = arith.constant 0 : index
    %c0_1 = arith.constant 0 : index
    %0 = vector.load %arg3[%c0, %c0_0, %c0_1] : memref<1x16x32xbf16, #tpu.memory_space<vmem>>, vector<1x16x32xbf16>
    %1 = vector.shape_cast %0 : vector<1x16x32xbf16> to vector<16x32xbf16>
    %c0_2 = arith.constant 0 : index
    %c0_3 = arith.constant 0 : index
    %c0_4 = arith.constant 0 : index
    %2 = vector.load %arg2[%c0_2, %c0_3, %c0_4] : memref<1x32x64xbf16, #tpu.memory_space<vmem>>, vector<1x32x64xbf16>
    %3 = vector.shape_cast %2 : vector<1x32x64xbf16> to vector<32x64xbf16>
    %cst = arith.constant dense<0.000000e+00> : vector<16x64xf32>
    %4 = tpu.matmul %1, %3, %cst {dimension_numbers = #tpu.dot_dimension_numbers<[1], [0], [0], [1], [0, 0, 1, 1], [], []>} : vector<16x32xbf16>, vector<32x64xbf16>, vector<16x64xf32> -> vector<16x64xf32>
    %5 = arith.truncf %4 : vector<16x64xf32> to vector<16x64xbf16>
    %c0_5 = arith.constant 0 : index
    %c0_6 = arith.constant 0 : index
    %c0_7 = arith.constant 0 : index
    %6 = vector.load %arg4[%c0_5, %c0_6, %c0_7] : memref<1x64x64xbf16, #tpu.memory_space<vmem>>, vector<1x64x64xbf16>
    %7 = vector.shape_cast %6 : vector<1x64x64xbf16> to vector<64x64xbf16>
    %cst_8 = arith.constant dense<0.000000e+00> : vector<16x64xf32>
    %8 = tpu.matmul %5, %7, %cst_8 {dimension_numbers = #tpu.dot_dimension_numbers<[1], [0], [0], [1], [0, 0, 1, 1], [], []>} : vector<16x64xbf16>, vector<64x64xbf16>, vector<16x64xf32> -> vector<16x64xf32>
    %cst_9 = arith.constant 0.000000e+00 : f32
    %9 = vector.broadcast %cst_9 : f32 to vector<16x64xf32>
    %10 = arith.cmpf oge, %8, %9 : vector<16x64xf32>
    %cst_10 = arith.constant 0.229166672 : f32
    %11 = vector.broadcast %cst_10 : f32 to vector<16x64xf32>
    %12 = arith.mulf %8, %11 : vector<16x64xf32>
    %13 = arith.select %10, %8, %12 : vector<16x64xi1>, vector<16x64xf32>
    %14 = arith.truncf %13 : vector<16x64xf32> to vector<16x64xbf16>
    %c0_11 = arith.constant 0 : index
    %c0_12 = arith.constant 0 : index
    %c0_13 = arith.constant 0 : index
    %15 = vector.load %arg5[%c0_11, %c0_12, %c0_13] : memref<1x16x64xbf16, #tpu.memory_space<vmem>>, vector<1x16x64xbf16>
    %16 = vector.shape_cast %15 : vector<1x16x64xbf16> to vector<16x64xbf16>
    %17 = vector.shape_cast %14 : vector<16x64xbf16> to vector<1x16x64xbf16>
    tpu.vector_store %arg5[%c0_11, %c0_12, %c0_13], %17 {strides = array<i32>} : memref<1x16x64xbf16, #tpu.memory_space<vmem>>, vector<1x16x64xbf16>,
    return
  }
  func.func @transform_0(%arg0: i32, %arg1: i32) -> (i32, i32, i32) {
    %c0_i32 = arith.constant 0 : i32
    %c0_i32_0 = arith.constant 0 : i32
    %c0_i32_1 = arith.constant 0 : i32
    return %arg0, %c0_i32, %c0_i32_0 : i32, i32, i32
  }
  func.func @transform_1(%arg0: i32, %arg1: i32) -> (i32, i32, i32) {
    %c0_i32 = arith.constant 0 : i32
    %c0_i32_0 = arith.constant 0 : i32
    %c0_i32_1 = arith.constant 0 : i32
    return %arg0, %c0_i32, %c0_i32_0 : i32, i32, i32
  }
  func.func @transform_2(%arg0: i32, %arg1: i32) -> (i32, i32, i32) {
    %c0_i32 = arith.constant 0 : i32
    %c0_i32_0 = arith.constant 0 : i32
    return %arg0, %c0_i32, %arg1 : i32, i32, i32
  }
  func.func @transform_3(%arg0: i32, %arg1: i32) -> (i32, i32, i32) {
    %c0_i32 = arith.constant 0 : i32
    %c0_i32_0 = arith.constant 0 : i32
    return %arg0, %c0_i32, %arg1 : i32, i32, i32
  }
}

</mosaic_0001>

<llo_original>
// kernel: _grcu_core.3
$region0: #{_grcu_core.3}
  #allocation0 [shape = 'u32[]', space=smem, size = 0x4, offset = 0x4, fixed_abs, tag = 'smem constant byte address 0x4 - core index']
  #allocation1 [shape = 'u32[144,128]{1,0:T(1,128)}', space=vmem, size = 0x12000, scoped, tag = 'internal scratch']
  %s0 = inlined_call_operand.vmem [shape: bf16[3,32,64], index: 0, kind: input, shape index: {}]
  %s1 = inlined_call_operand.vmem [shape: bf16[3,16,32], index: 1, kind: input, shape index: {}]
  %s2 = inlined_call_operand.vmem [shape: bf16[3,64,64], index: 2, kind: input, shape index: {}]
  %s3 = inlined_call_operand.vmem [shape: bf16[3,16,64], index: 3, kind: output, shape index: {}]
  %s4 = sld [smem:[#allocation0]]
  $region45: #{_grcu_core.3} parent=0
    _
  %s6 = ssub.s32 1, %s4
  %s7 = scalar_select 0, %s6, %s4
  loop: start=0, step=1, limit=5
  $region2: #{_grcu_core.3} parent=0 // loop_pre_header
    _
  $region3: #{_grcu_core.3} parent=0 // loop_header
    %s9 = sphi 0, %s13
    %p10 = scmp.ge.s32.totalorder %s9, 5
    %s16 = sphi 0, %s28
    %s17 = sphi 0, %s24
    %s18 = sphi 0, %s16
    %s19 = sphi 0, %s17
    %s20 = sphi 0, %s18
    %s21 = sphi 0, %s19
    %s31 = sphi 0, %s33
    %s34 = sphi 0, %s31
    %s35 = sphi 0, %s34
    %s51 = sphi 0, %s35
    %s57 = sphi 0, %s59
    %s60 = sphi 0, %s57
    %s61 = sphi 0, %s60
    %s77 = sphi 0, %s61
    %s85 = sphi 0, %s87
    %s88 = sphi 0, %s85
    %s89 = sphi 0, %s88
    %s105 = sphi 0, %s89
    %s113 = sphi 0, %s115
    %s116 = sphi 0, %s113
    %s117 = sphi 0, %s116
    %s133 = sphi 0, %s117
  $region4: #{_grcu_core.3} parent=0 // loop_header_branch
    %12 = sbr.rel (%p10) target = $region8
  $region5: #{_grcu_core.3} parent=0 // loop_body
    %s14 = ssub.s32 %s9, 1
    %s15 = ssub.s32 %s9, 2
    %s22 = sadd.s32 1, %s17
    %p23 = scmp.ge.s32.totalorder %s22, 1
    %s24 = scalar_select %p23, 0, %s22
    %s25 = sadd.s32 1, %s16
    %s26 = scalar_select %p23, %s25, %s16
    %p27 = scmp.ge.s32.totalorder %s26, 3
    %s28 = scalar_select %p27, 0, %s26
    %s29 = ssub.s32 %s16, %s28
    %p30 = scmp.eq.s32.totalorder %s29, 0
    %s32 = sadd.s32 %s31, 1
    %s33 = scalar_select %p30, %s31, %s32
    %p36 = pneg %p30
    %p37 = scmp.eq.s32.totalorder %s9, 2
    %p38 = por %p36, %p37
    %p39 = scmp.ne.s32.totalorder %s31, %s34
    %p40 = scmp.eq.s32.totalorder %s9, 0
    %p41 = por %p39, %p40
    %p42 = scmp.ne.s32.totalorder %s31, %s34
    %p43 = scmp.eq.s32.totalorder %s14, 2
    %p44 = por %p42, %p43
    %p45 = scmp.ne.s32.totalorder %s34, %s35
    %p46 = scmp.eq.s32.totalorder %s14, 0
    %p47 = por %p45, %p46
    %p48 = scmp.ne.s32.totalorder %s34, %s35
    %p49 = scmp.eq.s32.totalorder %s15, 2
    %p50 = por %p48, %p49
    %p52 = scmp.ne.s32.totalorder %s35, %s51
    %p53 = scmp.eq.s32.totalorder %s15, 0
    %p54 = por %p52, %p53
    %s55 = ssub.s32 %s16, %s28
    %p56 = scmp.eq.s32.totalorder %s55, 0
    %s58 = sadd.s32 %s57, 1
    %s59 = scalar_select %p56, %s57, %s58
    %p62 = pneg %p56
    %p63 = scmp.eq.s32.totalorder %s9, 2
    %p64 = por %p62, %p63
    %p65 = scmp.ne.s32.totalorder %s57, %s60
    %p66 = scmp.eq.s32.totalorder %s9, 0
    %p67 = por %p65, %p66
    %p68 = scmp.ne.s32.totalorder %s57, %s60
    %p69 = scmp.eq.s32.totalorder %s14, 2
    %p70 = por %p68, %p69
    %p71 = scmp.ne.s32.totalorder %s60, %s61
    %p72 = scmp.eq.s32.totalorder %s14, 0
    %p73 = por %p71, %p72
    %p74 = scmp.ne.s32.totalorder %s60, %s61
    %p75 = scmp.eq.s32.totalorder %s15, 2
    %p76 = por %p74, %p75
    %p78 = scmp.ne.s32.totalorder %s61, %s77
    %p79 = scmp.eq.s32.totalorder %s15, 0
    %p80 = por %p78, %p79
    %s81 = ssub.s32 %s16, %s28
    %s82 = ssub.s32 %s17, %s24
    %s83 = sor.u32 %s81, %s82
    %p84 = scmp.eq.s32.totalorder %s83, 0
    %s86 = sadd.s32 %s85, 1
    %s87 = scalar_select %p84, %s85, %s86
    %p90 = pneg %p84
    %p91 = scmp.eq.s32.totalorder %s9, 2
    %p92 = por %p90, %p91
    %p93 = scmp.ne.s32.totalorder %s85, %s88
    %p94 = scmp.eq.s32.totalorder %s9, 0
    %p95 = por %p93, %p94
    %p96 = scmp.ne.s32.totalorder %s85, %s88
    %p97 = scmp.eq.s32.totalorder %s14, 2
    %p98 = por %p96, %p97
    %p99 = scmp.ne.s32.totalorder %s88, %s89
    %p100 = scmp.eq.s32.totalorder %s14, 0
    %p101 = por %p99, %p100
    %p102 = scmp.ne.s32.totalorder %s88, %s89
    %p103 = scmp.eq.s32.totalorder %s15, 2
    %p104 = por %p102, %p103
    %p106 = scmp.ne.s32.totalorder %s89, %s105
    %p107 = scmp.eq.s32.totalorder %s15, 0
    %p108 = por %p106, %p107
    %s109 = ssub.s32 %s16, %s28
    %s110 = ssub.s32 %s17, %s24
    %s111 = sor.u32 %s109, %s110
    %p112 = scmp.eq.s32.totalorder %s111, 0
    %s114 = sadd.s32 %s113, 1
    %s115 = scalar_select %p112, %s113, %s114
    %p118 = pneg %p112
    %p119 = scmp.eq.s32.totalorder %s9, 2
    %p120 = por %p118, %p119
    %p121 = scmp.ne.s32.totalorder %s113, %s116
    %p122 = scmp.eq.s32.totalorder %s9, 0
    %p123 = por %p121, %p122
    %p124 = scmp.ne.s32.totalorder %s113, %s116
    %p125 = scmp.eq.s32.totalorder %s14, 2
    %p126 = por %p124, %p125
    %p127 = scmp.ne.s32.totalorder %s116, %s117
    %p128 = scmp.eq.s32.totalorder %s14, 0
    %p129 = por %p127, %p128
    %p130 = scmp.ne.s32.totalorder %s116, %s117
    %p131 = scmp.eq.s32.totalorder %s15, 2
    %p132 = por %p130, %p131
    %p134 = scmp.ne.s32.totalorder %s117, %s133
    %p135 = scmp.eq.s32.totalorder %s15, 0
    %p136 = por %p134, %p135
    %p137 = scmp.le.s32.totalorder 1, %s9
    %p138 = scmp.lt.s32.totalorder %s9, 4
    %p139 = pnand %p137, %p138
    %p140 = pneg %p139
    // Predicated region
    $region9: #{_grcu_core.3} parent=5 // pred_check
      _
    $region10: #{_grcu_core.3} parent=5 // pred_check_branch
      %142 = sbr.rel (%p139) target = $region12
    $region11: #{_grcu_core.3} parent=5 // pred_region
      %s143 = ssub.s32 %s9, 1
    $region12: #{_grcu_core.3} parent=5 // pred_fallthru
      _
    %p144 = scmp.lt.s32.totalorder %s9, 3
    // Predicated region
    $region13: #{_grcu_core.3} parent=5 // pred_check
      %p145 = pneg %p144
    $region14: #{_grcu_core.3} parent=5 // pred_check_branch
      %147 = sbr.rel (%p145) target = $region16
    $region15: #{_grcu_core.3} parent=5 // pred_region
      // Predicated region
      $region17: #{_grcu_core.3} parent=15 // pred_check
        %p148 = pneg %p41
      $region18: #{_grcu_core.3} parent=15 // pred_check_branch
        %150 = sbr.rel (%p148) target = $region20
      $region19: #{_grcu_core.3} parent=15 // pred_region
        %p151 = scmp.lt.s32.totalorder %s16, 2
        %s152 = scalar_select %p151, %s16, 2
        %s153 = smul.addr %s152, 4
        %s154 = smul.addr %s153, 4
        %s155 = scalar_lea.vmem %s0, %s154
      $region20: #{_grcu_core.3} parent=15 // pred_fallthru
        _
      // Predicated region
      $region21: #{_grcu_core.3} parent=15 // pred_check
        %p156 = pneg %p67
      $region22: #{_grcu_core.3} parent=15 // pred_check_branch
        %158 = sbr.rel (%p156) target = $region24
      $region23: #{_grcu_core.3} parent=15 // pred_region
        %p159 = scmp.lt.s32.totalorder %s16, 2
        %s160 = scalar_select %p159, %s16, 2
        %s161 = smul.addr %s160, 2
        %s162 = smul.addr %s161, 4
        %s163 = scalar_lea.vmem %s1, %s162
      $region24: #{_grcu_core.3} parent=15 // pred_fallthru
        _
      // Predicated region
      $region25: #{_grcu_core.3} parent=15 // pred_check
        %p164 = pneg %p95
      $region26: #{_grcu_core.3} parent=15 // pred_check_branch
        %166 = sbr.rel (%p164) target = $region28
      $region27: #{_grcu_core.3} parent=15 // pred_region
        %p167 = scmp.lt.s32.totalorder %s16, 2
        %s168 = scalar_select %p167, %s16, 2
        %p169 = scmp.lt.s32.totalorder %s17, 0
        %s170 = scalar_select %p169, %s17, 0
        %s171 = smul.addr %s168, 8
        %s172 = sadd.s32 %s170, %s171
        %s173 = smul.addr %s172, 4
        %s174 = scalar_lea.vmem %s2, %s173
      $region28: #{_grcu_core.3} parent=15 // pred_fallthru
        _
    $region16: #{_grcu_core.3} parent=5 // pred_fallthru
      _
    %p175 = scmp.le.s32.totalorder 1, %s9
    %p176 = scmp.lt.s32.totalorder %s9, 4
    %p177 = pnand %p175, %p176
    %p178 = pneg %p177
    // Predicated region
    $region29: #{_grcu_core.3} parent=5 // pred_check
      _
    $region30: #{_grcu_core.3} parent=5 // pred_check_branch
      %180 = sbr.rel (%p177) target = $region32
    $region31: #{_grcu_core.3} parent=5 // pred_region
      %s181 = ssub.s32 %s9, 1
      %p182 = scmp.lt.s32.totalorder %s18, 2
      %s183 = scalar_select %p182, %s18, 2
      %s184 = smul.addr %s183, 4
      %s185 = smul.addr %s184, 4
      %s186 = scalar_lea.vmem %s0, %s185
      %p187 = pneg %p47
      %p188 = pneg %p44
      %p189 = scmp.lt.s32.totalorder %s18, 2
      %s190 = scalar_select %p189, %s18, 2
      %s191 = smul.addr %s190, 2
      %s192 = smul.addr %s191, 4
      %s193 = scalar_lea.vmem %s1, %s192
      %p194 = pneg %p73
      %p195 = pneg %p70
      %p196 = scmp.lt.s32.totalorder %s18, 2
      %s197 = scalar_select %p196, %s18, 2
      %p198 = scmp.lt.s32.totalorder %s19, 0
      %s199 = scalar_select %p198, %s19, 0
      %s200 = smul.addr %s197, 8
      %s201 = sadd.s32 %s199, %s200
      %s202 = smul.addr %s201, 4
      %s203 = scalar_lea.vmem %s2, %s202
      %p204 = pneg %p101
      %p205 = pneg %p98
      %p206 = pneg %p129
      %p207 = pneg %p126
      %p208 = scmp.lt.s32.totalorder %s18, 2
      %s209 = scalar_select %p208, %s18, 2
      %p210 = scmp.lt.s32.totalorder %s19, 0
      %s211 = scalar_select %p210, %s19, 0
      %s212 = smul.addr %s209, 2
      %s213 = sadd.s32 %s211, %s212
      %s214 = smul.addr %s213, 4
      %s215 = scalar_lea.vmem %s3, %s214
      %p216 = scmp.lt.s32.totalorder %s18, 2
      %s217 = scalar_select %p216, %s18, 2
      %s218 = smul.addr %s217, 4
      %s219 = smul.addr %s218, 4
      %s220 = scalar_lea.vmem %s0, %s219
      %p221 = scmp.lt.s32.totalorder %s18, 2
      %s222 = scalar_select %p221, %s18, 2
      %s223 = smul.addr %s222, 2
      %s224 = smul.addr %s223, 4
      %s225 = scalar_lea.vmem %s1, %s224
      %p226 = scmp.lt.s32.totalorder %s18, 2
      %s227 = scalar_select %p226, %s18, 2
      %p228 = scmp.lt.s32.totalorder %s19, 0
      %s229 = scalar_select %p228, %s19, 0
      %s230 = smul.addr %s227, 8
      %s231 = sadd.s32 %s229, %s230
      %s232 = smul.addr %s231, 4
      %s233 = scalar_lea.vmem %s2, %s232
      %p234 = scmp.lt.s32.totalorder %s18, 2
      %s235 = scalar_select %p234, %s18, 2
      %p236 = scmp.lt.s32.totalorder %s19, 0
      %s237 = scalar_select %p236, %s19, 0
      %s238 = smul.addr %s235, 2
      %s239 = sadd.s32 %s237, %s238
      %s240 = smul.addr %s239, 4
      %s241 = scalar_lea.vmem %s3, %s240
      %v243 = vld [vmem:[%s225] sm:$0xf]
      %v244 = vld [vmem:[%s225 + $0x4] sm:$0xf]
      %v245 = vld [vmem:[%s220] sm:$0xf]
      %v246 = vld [vmem:[%s220 + $0x4] sm:$0xf]
      %v247 = vld [vmem:[%s220 + $0x8] sm:$0xf]
      %v248 = vld [vmem:[%s220 + $0xc] sm:$0xf]
      %v251 = vunpack.c.l.b16 %v243
      %v252 = vunpack.c.l.b16 %v244
      %v253 = vpack.c.b16 %v252, %v251
      %v258 = vunpack.c.l.b16 %v245
      %v259 = vunpack.c.l.b16 %v246
      %v260 = vunpack.c.l.b16 %v247
      %v261 = vunpack.c.l.b16 %v248
      %v262 = vpack.c.b16 %v259, %v258
      %v263 = vpack.c.b16 %v261, %v260
      %vm266 = vcmask 261120
      %v268 = vsel %vm266, %v253, 0
      %270 = vmatprep.subr.bf16.mxu0 0
      %271 = vmatpush1.bf16.msra.mxu0 %v262
      %272 = vmatprep.subr.bf16.mxu0 0
      %273 = vmatpush1.bf16.msra.mxu0 %v263
      %274 = vmatprep.subr.bf16.mxu0 0
      %275 = vmatpush1.bf16.msra.mxu0 0
      %276 = vmatprep.subr.bf16.mxu0 0
      %277 = vmatpush1.bf16.msra.mxu0 0
      %278 = vmatprep.subr.bf16.mxu0 0
      %279 = vmatpush1.bf16.msra.mxu0 0
      %280 = vmatprep.subr.bf16.mxu0 0
      %281 = vmatpush1.bf16.msra.mxu0 0
      %282 = vmatprep.subr.bf16.mxu0 0
      %283 = vmatpush1.bf16.msra.mxu0 0
      %284 = vmatprep.subr.bf16.mxu0 0
      %285 = vmatpush1.bf16.msra.mxu0 0
      %286 = vmatprep.subr.bf16.mxu0 0
      %287 = vmatpush1.bf16.msra.mxu0 0
      %288 = vmatprep.subr.bf16.mxu0 0
      %289 = vmatpush1.bf16.msra.mxu0 0
      %290 = vmatprep.subr.bf16.mxu0 0
      %291 = vmatpush1.bf16.msra.mxu0 0
      %292 = vmatprep.subr.bf16.mxu0 0
      %293 = vmatpush1.bf16.msra.mxu0 0
      %294 = vmatprep.subr.bf16.mxu0 0
      %295 = vmatpush1.bf16.msra.mxu0 0
      %296 = vmatprep.subr.bf16.mxu0 0
      %297 = vmatpush1.bf16.msra.mxu0 0
      %298 = vmatprep.subr.bf16.mxu0 0
      %299 = vmatpush1.bf16.msra.mxu0 0
      %300 = vmatprep.subr.bf16.mxu0 0
      %301 = vmatpush1.bf16.msra.mxu0 0
      %302 = vmatprep.mubr.bf16.mxu0 0
      %303 = vmatmul.mubr.bf16.gmra.mrb[0].mxu0 %v268
      %v304 = vpop.f32.mrb[0].mxu0
      %v305 = vadd.f32 0.0, %v304
      %v306 = vpop.f32.mrb[0].mxu0
      %v307 = vpop.f32.mrb[0].mxu0
      %v308 = vadd.f32 0.0, %v307
      %v309 = vpop.f32.mrb[0].mxu0
      %310 = vdwg.mxu0
      %v311 = vpack.c.bf16 %v308, %v305
      %v312 = vld [vmem:[%s233] sm:$0xf]
      %v313 = vld [vmem:[%s233 + $0x4] sm:$0xf]
      %v314 = vld [vmem:[%s233 + $0x8] sm:$0xf]
      %v315 = vld [vmem:[%s233 + $0xc] sm:$0xf]
      %v316 = vld [vmem:[%s233 + $0x10] sm:$0xf]
      %v317 = vld [vmem:[%s233 + $0x14] sm:$0xf]
      %v318 = vld [vmem:[%s233 + $0x18] sm:$0xf]
      %v319 = vld [vmem:[%s233 + $0x1c] sm:$0xf]
      %v328 = vunpack.c.l.b16 %v312
      %v329 = vunpack.c.l.b16 %v313
      %v330 = vunpack.c.l.b16 %v314
      %v331 = vunpack.c.l.b16 %v315
      %v332 = vunpack.c.l.b16 %v316
      %v333 = vunpack.c.l.b16 %v317
      %v334 = vunpack.c.l.b16 %v318
      %v335 = vunpack.c.l.b16 %v319
      %v336 = vpack.c.b16 %v329, %v328
      %v337 = vpack.c.b16 %v331, %v330
      %v338 = vpack.c.b16 %v333, %v332
      %v339 = vpack.c.b16 %v335, %v334
      %vm344 = vcmask 523264
      %v346 = vsel %vm344, %v311, 0
      %348 = vmatprep.subr.bf16.mxu0 0
      %349 = vmatpush1.bf16.msra.mxu0 %v336
      %350 = vmatprep.subr.bf16.mxu0 0
      %351 = vmatpush1.bf16.msra.mxu0 %v337
      %352 = vmatprep.subr.bf16.mxu0 0
      %353 = vmatpush1.bf16.msra.mxu0 %v338
      %354 = vmatprep.subr.bf16.mxu0 0
      %355 = vmatpush1.bf16.msra.mxu0 %v339
      %356 = vmatprep.subr.bf16.mxu0 0
      %357 = vmatpush1.bf16.msra.mxu0 0
      %358 = vmatprep.subr.bf16.mxu0 0
      %359 = vmatpush1.bf16.msra.mxu0 0
      %360 = vmatprep.subr.bf16.mxu0 0
      %361 = vmatpush1.bf16.msra.mxu0 0
      %362 = vmatprep.subr.bf16.mxu0 0
      %363 = vmatpush1.bf16.msra.mxu0 0
      %364 = vmatprep.subr.bf16.mxu0 0
      %365 = vmatpush1.bf16.msra.mxu0 0
      %366 = vmatprep.subr.bf16.mxu0 0
      %367 = vmatpush1.bf16.msra.mxu0 0
      %368 = vmatprep.subr.bf16.mxu0 0
      %369 = vmatpush1.bf16.msra.mxu0 0
      %370 = vmatprep.subr.bf16.mxu0 0
      %371 = vmatpush1.bf16.msra.mxu0 0
      %372 = vmatprep.subr.bf16.mxu0 0
      %373 = vmatpush1.bf16.msra.mxu0 0
      %374 = vmatprep.subr.bf16.mxu0 0
      %375 = vmatpush1.bf16.msra.mxu0 0
      %376 = vmatprep.subr.bf16.mxu0 0
      %377 = vmatpush1.bf16.msra.mxu0 0
      %378 = vmatprep.subr.bf16.mxu0 0
      %379 = vmatpush1.bf16.msra.mxu0 0
      %380 = vmatprep.mubr.bf16.mxu0 0
      %381 = vmatmul.mubr.bf16.gmra.mrb[0].mxu0 %v346
      %v382 = vpop.f32.mrb[0].mxu0
      %v383 = vadd.f32 0.0, %v382
      %v384 = vpop.f32.mrb[0].mxu0
      %v385 = vpop.f32.mrb[0].mxu0
      %v386 = vadd.f32 0.0, %v385
      %v387 = vpop.f32.mrb[0].mxu0
      %388 = vdwg.mxu0
      %vm389 = vcmp.ge.f32.partialorder %v383, 0.0
      %vm390 = vcmp.ge.f32.partialorder %v386, 0.0
      %v391 = vmul.f32 %v383, 0.22916667
      %v392 = vmul.f32 %v386, 0.22916667
      %v393 = vsel %vm389, %v383, %v391
      %v394 = vsel %vm390, %v386, %v392
      %v395 = vpack.c.bf16 %v394, %v393
      %v397 = vunpack.c.l.b16 %v395
      %v398 = vunpack.c.h.b16 %v395
      %v399 = vpack.c.b16 %v397, %v397
      %v400 = vpack.c.b16 %v398, %v398
      %vm403 = vcmask 519168
      %404 = vst.msk [vmem:[%s241] sm:$0xf] %vm403, %v399
      %405 = vst.msk [vmem:[%s241 + $0x4] sm:$0xf] %vm403, %v400
      %p406 = scmp.lt.s32.totalorder %s18, 2
      %s407 = scalar_select %p406, %s18, 2
      %p408 = scmp.lt.s32.totalorder %s19, 0
      %s409 = scalar_select %p408, %s19, 0
      %s410 = smul.addr %s407, 2
      %s411 = sadd.s32 %s409, %s410
      %s412 = smul.addr %s411, 4
      %s413 = scalar_lea.vmem %s3, %s412
      // Predicated region
      $region33: #{_grcu_core.3} parent=31 // pred_check
        %p414 = pneg %p126
      $region34: #{_grcu_core.3} parent=31 // pred_check_branch
        %416 = sbr.rel (%p414) target = $region36
      $region35: #{_grcu_core.3} parent=31 // pred_region
        _
      $region36: #{_grcu_core.3} parent=31 // pred_fallthru
        _
    $region32: #{_grcu_core.3} parent=5 // pred_fallthru
      _
    %p417 = scmp.le.s32.totalorder 2, %s9
    // Predicated region
    $region37: #{_grcu_core.3} parent=5 // pred_check
      %p418 = pneg %p417
    $region38: #{_grcu_core.3} parent=5 // pred_check_branch
      %420 = sbr.rel (%p418) target = $region40
    $region39: #{_grcu_core.3} parent=5 // pred_region
      %s421 = ssub.s32 %s9, 2
      // Predicated region
      $region41: #{_grcu_core.3} parent=39 // pred_check
        %p422 = pneg %p132
      $region42: #{_grcu_core.3} parent=39 // pred_check_branch
        %424 = sbr.rel (%p422) target = $region44
      $region43: #{_grcu_core.3} parent=39 // pred_region
        %p425 = scmp.lt.s32.totalorder %s20, 2
        %s426 = scalar_select %p425, %s20, 2
        %p427 = scmp.lt.s32.totalorder %s21, 0
        %s428 = scalar_select %p427, %s21, 0
        %s429 = smul.addr %s426, 2
        %s430 = sadd.s32 %s428, %s429
        %s431 = smul.addr %s430, 4
        %s432 = scalar_lea.vmem %s3, %s431
      $region44: #{_grcu_core.3} parent=39 // pred_fallthru
        _
    $region40: #{_grcu_core.3} parent=5 // pred_fallthru
      _
  $region6: #{_grcu_core.3} parent=0 // loop_footer
    %s13 = sadd.s32 1, %s9
  $region7: #{_grcu_core.3} parent=0 // loop_footer_branch
    %8 = sbr.rel target = $region3
  $region8: #{_grcu_core.3} parent=0 // loop_exit
    _

// kernel: _grcu_core.2
$region0: #{_grcu_core.2}
  #allocation0 [shape = 'u32[]', space=smem, size = 0x4, offset = 0x4, fixed_abs, tag = 'smem constant byte address 0x4 - core index']
  #allocation1 [shape = 'u32[144,128]{1,0:T(1,128)}', space=vmem, size = 0x12000, scoped, tag = 'internal scratch']
  #allocation2 [shape = 'f32[32,16]{1,0:T(8,128)}', space=vmem, size = 0x4000, scoped, tag = 'scratch operand']
  %s0 = inlined_call_operand.vmem [shape: bf16[3,32,16], index: 0, kind: input, shape index: {}]
  %s1 = inlined_call_operand.vmem [shape: bf16[64,32], index: 1, kind: input, shape index: {}]
  %s2 = inlined_call_operand.vmem [shape: bf16[64,32], index: 2, kind: input, shape index: {}]
  %s3 = inlined_call_operand.vmem [shape: f32[64,16], index: 3, kind: input, shape index: {}]
  %s4 = inlined_call_operand.vmem [shape: bf16[32,32], index: 4, kind: input, shape index: {}]
  %s5 = inlined_call_operand.vmem [shape: bf16[32,32], index: 5, kind: input, shape index: {}]
  %s6 = inlined_call_operand.vmem [shape: f32[32,16], index: 6, kind: input, shape index: {}]
  %s7 = inlined_call_operand.vmem [shape: f32[32,16], index: 7, kind: input, shape index: {}]
  %s8 = inlined_call_operand.vmem [shape: bf16[3,32,16], index: 8, kind: output, shape index: {}]
  %s9 = sld [smem:[#allocation0]]
  $region69: #{_grcu_core.2} parent=0
    _
  %s11 = ssub.s32 1, %s9
  %s12 = scalar_select 0, %s11, %s9
  loop: start=0, step=1, limit=5
  $region2: #{_grcu_core.2} parent=0 // loop_pre_header
    _
  $region3: #{_grcu_core.2} parent=0 // loop_header
    %s14 = sphi 0, %s18
    %p15 = scmp.ge.s32.totalorder %s14, 5
    %s24 = sphi 0, %s26
    %s27 = sphi 0, %s24
    %s28 = sphi 0, %s27
    %s44 = sphi 0, %s28
    %s48 = sphi 0, %s48
    %s50 = sphi 0, %s48
    %s51 = sphi 0, %s50
    %s65 = sphi 0, %s51
    %s69 = sphi 0, %s69
    %s71 = sphi 0, %s69
    %s72 = sphi 0, %s71
    %s86 = sphi 0, %s72
    %s90 = sphi 0, %s90
    %s92 = sphi 0, %s90
    %s93 = sphi 0, %s92
    %s107 = sphi 0, %s93
    %s111 = sphi 0, %s111
    %s113 = sphi 0, %s111
    %s114 = sphi 0, %s113
    %s128 = sphi 0, %s114
    %s132 = sphi 0, %s132
    %s134 = sphi 0, %s132
    %s135 = sphi 0, %s134
    %s149 = sphi 0, %s135
    %s153 = sphi 0, %s153
    %s155 = sphi 0, %s153
    %s156 = sphi 0, %s155
    %s170 = sphi 0, %s156
    %s174 = sphi 0, %s174
    %s176 = sphi 0, %s174
    %s177 = sphi 0, %s176
    %s191 = sphi 0, %s177
    %s197 = sphi 0, %s199
    %s200 = sphi 0, %s197
    %s201 = sphi 0, %s200
    %s217 = sphi 0, %s201
  $region4: #{_grcu_core.2} parent=0 // loop_header_branch
    %17 = sbr.rel (%p15) target = $region8
  $region5: #{_grcu_core.2} parent=0 // loop_body
    %s19 = ssub.s32 %s14, 1
    %s20 = ssub.s32 %s14, 2
    %s21 = sadd.s32 %s14, 1
    %s22 = ssub.s32 %s14, %s21
    %p23 = scmp.eq.s32.totalorder %s22, 0
    %s25 = sadd.s32 %s24, 1
    %s26 = scalar_select %p23, %s24, %s25
    %p29 = pneg %p23
    %p30 = scmp.eq.s32.totalorder %s14, 2
    %p31 = por %p29, %p30
    %p32 = scmp.ne.s32.totalorder %s24, %s27
    %p33 = scmp.eq.s32.totalorder %s14, 0
    %p34 = por %p32, %p33
    %p35 = scmp.ne.s32.totalorder %s24, %s27
    %p36 = scmp.eq.s32.totalorder %s19, 2
    %p37 = por %p35, %p36
    %p38 = scmp.ne.s32.totalorder %s27, %s28
    %p39 = scmp.eq.s32.totalorder %s19, 0
    %p40 = por %p38, %p39
    %p41 = scmp.ne.s32.totalorder %s27, %s28
    %p42 = scmp.eq.s32.totalorder %s20, 2
    %p43 = por %p41, %p42
    %p45 = scmp.ne.s32.totalorder %s28, %s44
    %p46 = scmp.eq.s32.totalorder %s20, 0
    %p47 = por %p45, %p46
    %s49 = sadd.s32 %s48, 1
    %p52 = scmp.eq.s32.totalorder %s14, 2
    %p53 = scmp.ne.s32.totalorder %s48, %s50
    %p54 = scmp.eq.s32.totalorder %s14, 0
    %p55 = por %p53, %p54
    %p56 = scmp.ne.s32.totalorder %s48, %s50
    %p57 = scmp.eq.s32.totalorder %s19, 2
    %p58 = por %p56, %p57
    %p59 = scmp.ne.s32.totalorder %s50, %s51
    %p60 = scmp.eq.s32.totalorder %s19, 0
    %p61 = por %p59, %p60
    %p62 = scmp.ne.s32.totalorder %s50, %s51
    %p63 = scmp.eq.s32.totalorder %s20, 2
    %p64 = por %p62, %p63
    %p66 = scmp.ne.s32.totalorder %s51, %s65
    %p67 = scmp.eq.s32.totalorder %s20, 0
    %p68 = por %p66, %p67
    %s70 = sadd.s32 %s69, 1
    %p73 = scmp.eq.s32.totalorder %s14, 2
    %p74 = scmp.ne.s32.totalorder %s69, %s71
    %p75 = scmp.eq.s32.totalorder %s14, 0
    %p76 = por %p74, %p75
    %p77 = scmp.ne.s32.totalorder %s69, %s71
    %p78 = scmp.eq.s32.totalorder %s19, 2
    %p79 = por %p77, %p78
    %p80 = scmp.ne.s32.totalorder %s71, %s72
    %p81 = scmp.eq.s32.totalorder %s19, 0
    %p82 = por %p80, %p81
    %p83 = scmp.ne.s32.totalorder %s71, %s72
    %p84 = scmp.eq.s32.totalorder %s20, 2
    %p85 = por %p83, %p84
    %p87 = scmp.ne.s32.totalorder %s72, %s86
    %p88 = scmp.eq.s32.totalorder %s20, 0
    %p89 = por %p87, %p88
    %s91 = sadd.s32 %s90, 1
    %p94 = scmp.eq.s32.totalorder %s14, 2
    %p95 = scmp.ne.s32.totalorder %s90, %s92
    %p96 = scmp.eq.s32.totalorder %s14, 0
    %p97 = por %p95, %p96
    %p98 = scmp.ne.s32.totalorder %s90, %s92
    %p99 = scmp.eq.s32.totalorder %s19, 2
    %p100 = por %p98, %p99
    %p101 = scmp.ne.s32.totalorder %s92, %s93
    %p102 = scmp.eq.s32.totalorder %s19, 0
    %p103 = por %p101, %p102
    %p104 = scmp.ne.s32.totalorder %s92, %s93
    %p105 = scmp.eq.s32.totalorder %s20, 2
    %p106 = por %p104, %p105
    %p108 = scmp.ne.s32.totalorder %s93, %s107
    %p109 = scmp.eq.s32.totalorder %s20, 0
    %p110 = por %p108, %p109
    %s112 = sadd.s32 %s111, 1
    %p115 = scmp.eq.s32.totalorder %s14, 2
    %p116 = scmp.ne.s32.totalorder %s111, %s113
    %p117 = scmp.eq.s32.totalorder %s14, 0
    %p118 = por %p116, %p117
    %p119 = scmp.ne.s32.totalorder %s111, %s113
    %p120 = scmp.eq.s32.totalorder %s19, 2
    %p121 = por %p119, %p120
    %p122 = scmp.ne.s32.totalorder %s113, %s114
    %p123 = scmp.eq.s32.totalorder %s19, 0
    %p124 = por %p122, %p123
    %p125 = scmp.ne.s32.totalorder %s113, %s114
    %p126 = scmp.eq.s32.totalorder %s20, 2
    %p127 = por %p125, %p126
    %p129 = scmp.ne.s32.totalorder %s114, %s128
    %p130 = scmp.eq.s32.totalorder %s20, 0
    %p131 = por %p129, %p130
    %s133 = sadd.s32 %s132, 1
    %p136 = scmp.eq.s32.totalorder %s14, 2
    %p137 = scmp.ne.s32.totalorder %s132, %s134
    %p138 = scmp.eq.s32.totalorder %s14, 0
    %p139 = por %p137, %p138
    %p140 = scmp.ne.s32.totalorder %s132, %s134
    %p141 = scmp.eq.s32.totalorder %s19, 2
    %p142 = por %p140, %p141
    %p143 = scmp.ne.s32.totalorder %s134, %s135
    %p144 = scmp.eq.s32.totalorder %s19, 0
    %p145 = por %p143, %p144
    %p146 = scmp.ne.s32.totalorder %s134, %s135
    %p147 = scmp.eq.s32.totalorder %s20, 2
    %p148 = por %p146, %p147
    %p150 = scmp.ne.s32.totalorder %s135, %s149
    %p151 = scmp.eq.s32.totalorder %s20, 0
    %p152 = por %p150, %p151
    %s154 = sadd.s32 %s153, 1
    %p157 = scmp.eq.s32.totalorder %s14, 2
    %p158 = scmp.ne.s32.totalorder %s153, %s155
    %p159 = scmp.eq.s32.totalorder %s14, 0
    %p160 = por %p158, %p159
    %p161 = scmp.ne.s32.totalorder %s153, %s155
    %p162 = scmp.eq.s32.totalorder %s19, 2
    %p163 = por %p161, %p162
    %p164 = scmp.ne.s32.totalorder %s155, %s156
    %p165 = scmp.eq.s32.totalorder %s19, 0
    %p166 = por %p164, %p165
    %p167 = scmp.ne.s32.totalorder %s155, %s156
    %p168 = scmp.eq.s32.totalorder %s20, 2
    %p169 = por %p167, %p168
    %p171 = scmp.ne.s32.totalorder %s156, %s170
    %p172 = scmp.eq.s32.totalorder %s20, 0
    %p173 = por %p171, %p172
    %s175 = sadd.s32 %s174, 1
    %p178 = scmp.eq.s32.totalorder %s14, 2
    %p179 = scmp.ne.s32.totalorder %s174, %s176
    %p180 = scmp.eq.s32.totalorder %s14, 0
    %p181 = por %p179, %p180
    %p182 = scmp.ne.s32.totalorder %s174, %s176
    %p183 = scmp.eq.s32.totalorder %s19, 2
    %p184 = por %p182, %p183
    %p185 = scmp.ne.s32.totalorder %s176, %s177
    %p186 = scmp.eq.s32.totalorder %s19, 0
    %p187 = por %p185, %p186
    %p188 = scmp.ne.s32.totalorder %s176, %s177
    %p189 = scmp.eq.s32.totalorder %s20, 2
    %p190 = por %p188, %p189
    %p192 = scmp.ne.s32.totalorder %s177, %s191
    %p193 = scmp.eq.s32.totalorder %s20, 0
    %p194 = por %p192, %p193
    %s195 = ssub.s32 %s14, %s21
    %p196 = scmp.eq.s32.totalorder %s195, 0
    %s198 = sadd.s32 %s197, 1
    %s199 = scalar_select %p196, %s197, %s198
    %p202 = pneg %p196
    %p203 = scmp.eq.s32.totalorder %s14, 2
    %p204 = por %p202, %p203
    %p205 = scmp.ne.s32.totalorder %s197, %s200
    %p206 = scmp.eq.s32.totalorder %s14, 0
    %p207 = por %p205, %p206
    %p208 = scmp.ne.s32.totalorder %s197, %s200
    %p209 = scmp.eq.s32.totalorder %s19, 2
    %p210 = por %p208, %p209
    %p211 = scmp.ne.s32.totalorder %s200, %s201
    %p212 = scmp.eq.s32.totalorder %s19, 0
    %p213 = por %p211, %p212
    %p214 = scmp.ne.s32.totalorder %s200, %s201
    %p215 = scmp.eq.s32.totalorder %s20, 2
    %p216 = por %p214, %p215
    %p218 = scmp.ne.s32.totalorder %s201, %s217
    %p219 = scmp.eq.s32.totalorder %s20, 0
    %p220 = por %p218, %p219
    %p221 = scmp.le.s32.totalorder 1, %s14
    %p222 = scmp.lt.s32.totalorder %s14, 4
    %p223 = pnand %p221, %p222
    %p224 = pneg %p223
    // Predicated region
    $region9: #{_grcu_core.2} parent=5 // pred_check
      _
    $region10: #{_grcu_core.2} parent=5 // pred_check_branch
      %226 = sbr.rel (%p223) target = $region12
    $region11: #{_grcu_core.2} parent=5 // pred_region
      %s227 = ssub.s32 %s14, 1
      // Predicated region
      $region13: #{_grcu_core.2} parent=11 // pred_check
        %p228 = pneg %p61
      $region14: #{_grcu_core.2} parent=11 // pred_check_branch
        %230 = sbr.rel (%p228) target = $region16
      $region15: #{_grcu_core.2} parent=11 // pred_region
        _
      $region16: #{_grcu_core.2} parent=11 // pred_fallthru
        _
      // Predicated region
      $region17: #{_grcu_core.2} parent=11 // pred_check
        %p231 = pneg %p82
      $region18: #{_grcu_core.2} parent=11 // pred_check_branch
        %233 = sbr.rel (%p231) target = $region20
      $region19: #{_grcu_core.2} parent=11 // pred_region
        _
      $region20: #{_grcu_core.2} parent=11 // pred_fallthru
        _
      // Predicated region
      $region21: #{_grcu_core.2} parent=11 // pred_check
        %p234 = pneg %p103
      $region22: #{_grcu_core.2} parent=11 // pred_check_branch
        %236 = sbr.rel (%p234) target = $region24
      $region23: #{_grcu_core.2} parent=11 // pred_region
        _
      $region24: #{_grcu_core.2} parent=11 // pred_fallthru
        _
      // Predicated region
      $region25: #{_grcu_core.2} parent=11 // pred_check
        %p237 = pneg %p124
      $region26: #{_grcu_core.2} parent=11 // pred_check_branch
        %239 = sbr.rel (%p237) target = $region28
      $region27: #{_grcu_core.2} parent=11 // pred_region
        _
      $region28: #{_grcu_core.2} parent=11 // pred_fallthru
        _
      // Predicated region
      $region29: #{_grcu_core.2} parent=11 // pred_check
        %p240 = pneg %p145
      $region30: #{_grcu_core.2} parent=11 // pred_check_branch
        %242 = sbr.rel (%p240) target = $region32
      $region31: #{_grcu_core.2} parent=11 // pred_region
        _
      $region32: #{_grcu_core.2} parent=11 // pred_fallthru
        _
      // Predicated region
      $region33: #{_grcu_core.2} parent=11 // pred_check
        %p243 = pneg %p166
      $region34: #{_grcu_core.2} parent=11 // pred_check_branch
        %245 = sbr.rel (%p243) target = $region36
      $region35: #{_grcu_core.2} parent=11 // pred_region
        _
      $region36: #{_grcu_core.2} parent=11 // pred_fallthru
        _
      // Predicated region
      $region37: #{_grcu_core.2} parent=11 // pred_check
        %p246 = pneg %p187
      $region38: #{_grcu_core.2} parent=11 // pred_check_branch
        %248 = sbr.rel (%p246) target = $region40
      $region39: #{_grcu_core.2} parent=11 // pred_region
        _
      $region40: #{_grcu_core.2} parent=11 // pred_fallthru
        _
    $region12: #{_grcu_core.2} parent=5 // pred_fallthru
      _
    %p249 = scmp.lt.s32.totalorder %s14, 3
    // Predicated region
    $region41: #{_grcu_core.2} parent=5 // pred_check
      %p250 = pneg %p249
    $region42: #{_grcu_core.2} parent=5 // pred_check_branch
      %252 = sbr.rel (%p250) target = $region44
    $region43: #{_grcu_core.2} parent=5 // pred_region
      // Predicated region
      $region45: #{_grcu_core.2} parent=43 // pred_check
        %p253 = pneg %p34
      $region46: #{_grcu_core.2} parent=43 // pred_check_branch
        %255 = sbr.rel (%p253) target = $region48
      $region47: #{_grcu_core.2} parent=43 // pred_region
        %p256 = scmp.lt.s32.totalorder %s14, 2
        %s257 = scalar_select %p256, %s14, 2
        %s258 = smul.addr %s257, 4
        %s259 = smul.addr %s258, 4
        %s260 = scalar_lea.vmem %s0, %s259
      $region48: #{_grcu_core.2} parent=43 // pred_fallthru
        _
    $region44: #{_grcu_core.2} parent=5 // pred_fallthru
      _
    %p261 = scmp.le.s32.totalorder 1, %s14
    %p262 = scmp.lt.s32.totalorder %s14, 4
    %p263 = pnand %p261, %p262
    %p264 = pneg %p263
    // Predicated region
    $region49: #{_grcu_core.2} parent=5 // pred_check
      _
    $region50: #{_grcu_core.2} parent=5 // pred_check_branch
      %266 = sbr.rel (%p263) target = $region52
    $region51: #{_grcu_core.2} parent=5 // pred_region
      %s267 = ssub.s32 %s14, 1
      %p268 = scmp.lt.s32.totalorder %s19, 2
      %s269 = scalar_select %p268, %s19, 2
      %s270 = smul.addr %s269, 4
      %s271 = smul.addr %s270, 4
      %s272 = scalar_lea.vmem %s0, %s271
      %p273 = pneg %p40
      %p274 = pneg %p37
      %p275 = pneg %p61
      %p276 = pneg %p58
      %p277 = pneg %p82
      %p278 = pneg %p79
      %p279 = pneg %p103
      %p280 = pneg %p100
      %p281 = pneg %p124
      %p282 = pneg %p121
      %p283 = pneg %p145
      %p284 = pneg %p142
      %p285 = pneg %p166
      %p286 = pneg %p163
      %p287 = pneg %p187
      %p288 = pneg %p184
      %p289 = pneg %p213
      %p290 = pneg %p210
      %p291 = scmp.lt.s32.totalorder %s19, 2
      %s292 = scalar_select %p291, %s19, 2
      %s293 = smul.addr %s292, 4
      %s294 = smul.addr %s293, 4
      %s295 = scalar_lea.vmem %s8, %s294
      %p296 = scmp.lt.s32.totalorder %s19, 2
      %s297 = scalar_select %p296, %s19, 2
      %s298 = smul.addr %s297, 4
      %s299 = smul.addr %s298, 4
      %s300 = scalar_lea.vmem %s0, %s299
      %p301 = scmp.lt.s32.totalorder %s19, 2
      %s302 = scalar_select %p301, %s19, 2
      %s303 = smul.addr %s302, 4
      %s304 = smul.addr %s303, 4
      %s305 = scalar_lea.vmem %s8, %s304
      %p307 = scmp.eq.s32.totalorder %s19, 0
      // Predicated region
      $region53: #{_grcu_core.2} parent=51 // pred_check
        %p308 = pneg %p307
      $region54: #{_grcu_core.2} parent=51 // pred_check_branch
        %310 = sbr.rel (%p308) target = $region56
      $region55: #{_grcu_core.2} parent=51 // pred_region
        %v311 = vld [vmem:[%s7] sm:$0xff]
        %v312 = vld [vmem:[%s7 + $0x8] sm:$0xff]
        %v313 = vld [vmem:[%s7 + $0x10] sm:$0xff]
        %v314 = vld [vmem:[%s7 + $0x18] sm:$0xff]
        %vm315 = vcmask 130048
        %316 = vst.msk [vmem:[#allocation2] sm:$0xff] %vm315, %v311
        %317 = vst.msk [vmem:[#allocation2 + $0x8] sm:$0xff] %vm315, %v312
        %318 = vst.msk [vmem:[#allocation2 + $0x10] sm:$0xff] %vm315, %v313
        %319 = vst.msk [vmem:[#allocation2 + $0x18] sm:$0xff] %vm315, %v314
      $region56: #{_grcu_core.2} parent=51 // pred_fallthru
        _
      %v320 = vld [vmem:[#allocation2] sm:$0xff]
      %v321 = vld [vmem:[#allocation2 + $0x8] sm:$0xff]
      %v322 = vld [vmem:[#allocation2 + $0x10] sm:$0xff]
      %v323 = vld [vmem:[#allocation2 + $0x18] sm:$0xff]
      %v324 = vpack.c.bf16 %v321, %v320
      %v325 = vpack.c.bf16 %v323, %v322
      %v326 = vld [vmem:[%s300] sm:$0xf]
      %v327 = vld [vmem:[%s300 + $0x4] sm:$0xf]
      %v328 = vld [vmem:[%s300 + $0x8] sm:$0xf]
      %v329 = vld [vmem:[%s300 + $0xc] sm:$0xf]
      %v330 = vld [vmem:[%s1] sm:$0xf]
      %v331 = vld [vmem:[%s1 + $0x4] sm:$0xf]
      %v332 = vld [vmem:[%s1 + $0x8] sm:$0xf]
      %v333 = vld [vmem:[%s1 + $0xc] sm:$0xf]
      %v334 = vld [vmem:[%s1 + $0x10] sm:$0xf]
      %v335 = vld [vmem:[%s1 + $0x14] sm:$0xf]
      %v336 = vld [vmem:[%s1 + $0x18] sm:$0xf]
      %v337 = vld [vmem:[%s1 + $0x1c] sm:$0xf]
      %v338 = vld [vmem:[%s2] sm:$0xf]
      %v339 = vld [vmem:[%s2 + $0x4] sm:$0xf]
      %v340 = vld [vmem:[%s2 + $0x8] sm:$0xf]
      %v341 = vld [vmem:[%s2 + $0xc] sm:$0xf]
      %v342 = vld [vmem:[%s2 + $0x10] sm:$0xf]
      %v343 = vld [vmem:[%s2 + $0x14] sm:$0xf]
      %v344 = vld [vmem:[%s2 + $0x18] sm:$0xf]
      %v345 = vld [vmem:[%s2 + $0x1c] sm:$0xf]
      %v354 = vunpack.c.l.b16 %v338
      %v355 = vunpack.c.l.b16 %v339
      %v356 = vunpack.c.l.b16 %v340
      %v357 = vunpack.c.l.b16 %v341
      %v358 = vunpack.c.l.b16 %v342
      %v359 = vunpack.c.l.b16 %v343
      %v360 = vunpack.c.l.b16 %v344
      %v361 = vunpack.c.l.b16 %v345
      %v362 = vpack.c.b16 %v355, %v354
      %v363 = vpack.c.b16 %v357, %v356
      %v364 = vpack.c.b16 %v359, %v358
      %v365 = vpack.c.b16 %v361, %v360
      %vm366 = vcmask 261120
      %v368 = vsel %vm366, %v362, 0
      %v371 = vsel %vm366, %v363, 0
      %v374 = vsel %vm366, %v364, 0
      %v377 = vsel %vm366, %v365, 0
      %379 = vmatprep.subr.bf16.mxu0 0
      %380 = vmatpush1.bf16.msra.mxu0 %v324
      %381 = vmatprep.subr.bf16.mxu0 0
      %382 = vmatpush1.bf16.msra.mxu0 %v325
      %383 = vmatprep.subr.bf16.mxu0 0
      %384 = vmatpush1.bf16.msra.mxu0 0
      %385 = vmatprep.subr.bf16.mxu0 0
      %386 = vmatpush1.bf16.msra.mxu0 0
      %387 = vmatprep.subr.bf16.mxu0 0
      %388 = vmatpush1.bf16.msra.mxu0 0
      %389 = vmatprep.subr.bf16.mxu0 0
      %390 = vmatpush1.bf16.msra.mxu0 0
      %391 = vmatprep.subr.bf16.mxu0 0
      %392 = vmatpush1.bf16.msra.mxu0 0
      %393 = vmatprep.subr.bf16.mxu0 0
      %394 = vmatpush1.bf16.msra.mxu0 0
      %395 = vmatprep.subr.bf16.mxu0 0
      %396 = vmatpush1.bf16.msra.mxu0 0
      %397 = vmatprep.subr.bf16.mxu0 0
      %398 = vmatpush1.bf16.msra.mxu0 0
      %399 = vmatprep.subr.bf16.mxu0 0
      %400 = vmatpush1.bf16.msra.mxu0 0
      %401 = vmatprep.subr.bf16.mxu0 0
      %402 = vmatpush1.bf16.msra.mxu0 0
      %403 = vmatprep.subr.bf16.mxu0 0
      %404 = vmatpush1.bf16.msra.mxu0 0
      %405 = vmatprep.subr.bf16.mxu0 0
      %406 = vmatpush1.bf16.msra.mxu0 0
      %407 = vmatprep.subr.bf16.mxu0 0
      %408 = vmatpush1.bf16.msra.mxu0 0
      %409 = vmatprep.subr.bf16.mxu0 0
      %410 = vmatpush1.bf16.msra.mxu0 0
      %411 = vmatprep.mubr.bf16.mxu0 0
      %412 = vmatmul.mubr.bf16.gmra.mrb[0].mxu0 %v368
      %v413 = vpop.f32.mrb[0].mxu0
      %v414 = vadd.f32 0.0, %v413
      %v415 = vpop.f32.mrb[0].mxu0
      %v416 = vpop.f32.mrb[0].mxu0
      %v417 = vadd.f32 0.0, %v416
      %v418 = vpop.f32.mrb[0].mxu0
      %419 = vmatprep.mubr.bf16.mxu0 0
      %420 = vmatmul.mubr.bf16.gmra.mrb[0].mxu0 %v371
      %v421 = vpop.f32.mrb[0].mxu0
      %v422 = vadd.f32 0.0, %v421
      %v423 = vpop.f32.mrb[0].mxu0
      %v424 = vpop.f32.mrb[0].mxu0
      %v425 = vadd.f32 0.0, %v424
      %v426 = vpop.f32.mrb[0].mxu0
      %427 = vmatprep.mubr.bf16.mxu0 0
      %428 = vmatmul.mubr.bf16.gmra.mrb[0].mxu0 %v374
      %v429 = vpop.f32.mrb[0].mxu0
      %v430 = vadd.f32 0.0, %v429
      %v431 = vpop.f32.mrb[0].mxu0
      %v432 = vpop.f32.mrb[0].mxu0
      %v433 = vadd.f32 0.0, %v432
      %v434 = vpop.f32.mrb[0].mxu0
      %435 = vmatprep.mubr.bf16.mxu0 0
      %436 = vmatmul.mubr.bf16.gmra.mrb[0].mxu0 %v377
      %v437 = vpop.f32.mrb[0].mxu0
      %v438 = vadd.f32 0.0, %v437
      %v439 = vpop.f32.mrb[0].mxu0
      %v440 = vpop.f32.mrb[0].mxu0
      %v441 = vadd.f32 0.0, %v440
      %v442 = vpop.f32.mrb[0].mxu0
      %443 = vdwg.mxu0
      %v452 = vunpack.c.l.b16 %v330
      %v453 = vunpack.c.l.b16 %v331
      %v454 = vunpack.c.l.b16 %v332
      %v455 = vunpack.c.l.b16 %v333
      %v456 = vunpack.c.l.b16 %v334
      %v457 = vunpack.c.l.b16 %v335
      %v458 = vunpack.c.l.b16 %v336
      %v459 = vunpack.c.l.b16 %v337
      %v460 = vpack.c.b16 %v453, %v452
      %v461 = vpack.c.b16 %v455, %v454
      %v462 = vpack.c.b16 %v457, %v456
      %v463 = vpack.c.b16 %v459, %v458
      %v468 = vunpack.c.l.b16 %v326
      %v469 = vunpack.c.l.b16 %v327
      %v470 = vunpack.c.l.b16 %v328
      %v471 = vunpack.c.l.b16 %v329
      %v472 = vpack.c.b16 %v469, %v468
      %v473 = vpack.c.b16 %v471, %v470
      %v477 = vsel %vm366, %v460, 0
      %v480 = vsel %vm366, %v461, 0
      %v483 = vsel %vm366, %v462, 0
      %v486 = vsel %vm366, %v463, 0
      %488 = vmatprep.subr.bf16.mxu0 0
      %489 = vmatpush1.bf16.msra.mxu0 %v472
      %490 = vmatprep.subr.bf16.mxu0 0
      %491 = vmatpush1.bf16.msra.mxu0 %v473
      %492 = vmatprep.subr.bf16.mxu0 0
      %493 = vmatpush1.bf16.msra.mxu0 0
      %494 = vmatprep.subr.bf16.mxu0 0
      %495 = vmatpush1.bf16.msra.mxu0 0
      %496 = vmatprep.subr.bf16.mxu0 0
      %497 = vmatpush1.bf16.msra.mxu0 0
      %498 = vmatprep.subr.bf16.mxu0 0
      %499 = vmatpush1.bf16.msra.mxu0 0
      %500 = vmatprep.subr.bf16.mxu0 0
      %501 = vmatpush1.bf16.msra.mxu0 0
      %502 = vmatprep.subr.bf16.mxu0 0
      %503 = vmatpush1.bf16.msra.mxu0 0
      %504 = vmatprep.subr.bf16.mxu0 0
      %505 = vmatpush1.bf16.msra.mxu0 0
      %506 = vmatprep.subr.bf16.mxu0 0
      %507 = vmatpush1.bf16.msra.mxu0 0
      %508 = vmatprep.subr.bf16.mxu0 0
      %509 = vmatpush1.bf16.msra.mxu0 0
      %510 = vmatprep.subr.bf16.mxu0 0
      %511 = vmatpush1.bf16.msra.mxu0 0
      %512 = vmatprep.subr.bf16.mxu0 0
      %513 = vmatpush1.bf16.msra.mxu0 0
      %514 = vmatprep.subr.bf16.mxu0 0
      %515 = vmatpush1.bf16.msra.mxu0 0
      %516 = vmatprep.subr.bf16.mxu0 0
      %517 = vmatpush1.bf16.msra.mxu0 0
      %518 = vmatprep.subr.bf16.mxu0 0
      %519 = vmatpush1.bf16.msra.mxu0 0
      %520 = vmatprep.mubr.bf16.mxu0 0
      %521 = vmatmul.mubr.bf16.gmra.mrb[0].mxu0 %v477
      %v522 = vpop.f32.mrb[0].mxu0
      %v523 = vadd.f32 %v414, %v522
      %v524 = vpop.f32.mrb[0].mxu0
      %v525 = vpop.f32.mrb[0].mxu0
      %v526 = vadd.f32 %v417, %v525
      %v527 = vpop.f32.mrb[0].mxu0
      %528 = vmatprep.mubr.bf16.mxu0 0
      %529 = vmatmul.mubr.bf16.gmra.mrb[0].mxu0 %v480
      %v530 = vpop.f32.mrb[0].mxu0
      %v531 = vadd.f32 %v422, %v530
      %v532 = vpop.f32.mrb[0].mxu0
      %v533 = vpop.f32.mrb[0].mxu0
      %v534 = vadd.f32 %v425, %v533
      %v535 = vpop.f32.mrb[0].mxu0
      %536 = vmatprep.mubr.bf16.mxu0 0
      %537 = vmatmul.mubr.bf16.gmra.mrb[0].mxu0 %v483
      %v538 = vpop.f32.mrb[0].mxu0
      %v539 = vadd.f32 %v430, %v538
      %v540 = vpop.f32.mrb[0].mxu0
      %v541 = vpop.f32.mrb[0].mxu0
      %v542 = vadd.f32 %v433, %v541
      %v543 = vpop.f32.mrb[0].mxu0
      %544 = vmatprep.mubr.bf16.mxu0 0
      %545 = vmatmul.mubr.bf16.gmra.mrb[0].mxu0 %v486
      %v546 = vpop.f32.mrb[0].mxu0
      %v547 = vadd.f32 %v438, %v546
      %v548 = vpop.f32.mrb[0].mxu0
      %v549 = vpop.f32.mrb[0].mxu0
      %v550 = vadd.f32 %v441, %v549
      %v551 = vpop.f32.mrb[0].mxu0
      %552 = vdwg.mxu0
      %v553 = vld [vmem:[%s3] sm:$0xff]
      %v554 = vld [vmem:[%s3 + $0x8] sm:$0xff]
      %v555 = vld [vmem:[%s3 + $0x10] sm:$0xff]
      %v556 = vld [vmem:[%s3 + $0x18] sm:$0xff]
      %v557 = vld [vmem:[%s3 + $0x20] sm:$0xff]
      %v558 = vld [vmem:[%s3 + $0x28] sm:$0xff]
      %v559 = vld [vmem:[%s3 + $0x30] sm:$0xff]
      %v560 = vld [vmem:[%s3 + $0x38] sm:$0xff]
      %v561 = vadd.f32 %v523, %v553
      %v562 = vadd.f32 %v526, %v554
      %v563 = vadd.f32 %v531, %v555
      %v564 = vadd.f32 %v534, %v556
      %v565 = vadd.f32 %v539, %v557
      %v566 = vadd.f32 %v542, %v558
      %v567 = vadd.f32 %v547, %v559
      %v568 = vadd.f32 %v550, %v560
      %v569 = vxor.u32 %v561, 2147483648
      %v570 = vxor.u32 %v562, 2147483648
      %v571 = vxor.u32 %v563, 2147483648
      %v572 = vxor.u32 %v564, 2147483648
      %v573 = vxor.u32 %v565, 2147483648
      %v574 = vxor.u32 %v566, 2147483648
      %v575 = vxor.u32 %v567, 2147483648
      %v576 = vxor.u32 %v568, 2147483648
      %v577 = vmul.f32 %v569, 1.442695
      %v578 = vpow.pop %v577
      %v579 = vmul.f32 %v570, 1.442695
      %v580 = vpow.pop %v579
      %v581 = vmul.f32 %v571, 1.442695
      %v582 = vpow.pop %v581
      %v583 = vmul.f32 %v572, 1.442695
      %v584 = vpow.pop %v583
      %v585 = vmul.f32 %v573, 1.442695
      %v586 = vpow.pop %v585
      %v587 = vmul.f32 %v574, 1.442695
      %v588 = vpow.pop %v587
      %v589 = vmul.f32 %v575, 1.442695
      %v590 = vpow.pop %v589
      %v591 = vmul.f32 %v576, 1.442695
      %v592 = vpow.pop %v591
      %v593 = vadd.f32 %v578, 1.0
      %v594 = vadd.f32 %v580, 1.0
      %v595 = vadd.f32 %v582, 1.0
      %v596 = vadd.f32 %v584, 1.0
      %v597 = vadd.f32 %v586, 1.0
      %v598 = vadd.f32 %v588, 1.0
      %v599 = vadd.f32 %v590, 1.0
      %v600 = vadd.f32 %v592, 1.0
      %v601 = vrcp.pop %v593
      %v602 = vmul.f32 1.0, %v601
      %v603 = vrcp.pop %v594
      %v604 = vmul.f32 1.0, %v603
      %v605 = vrcp.pop %v595
      %v606 = vmul.f32 1.0, %v605
      %v607 = vrcp.pop %v596
      %v608 = vmul.f32 1.0, %v607
      %v609 = vrcp.pop %v597
      %v610 = vmul.f32 1.0, %v609
      %v611 = vrcp.pop %v598
      %v612 = vmul.f32 1.0, %v611
      %v613 = vrcp.pop %v599
      %v614 = vmul.f32 1.0, %v613
      %v615 = vrcp.pop %v600
      %v616 = vmul.f32 1.0, %v615
      %v617 = vld [vmem:[%s4] sm:$0xf]
      %v618 = vld [vmem:[%s4 + $0x4] sm:$0xf]
      %v619 = vld [vmem:[%s4 + $0x8] sm:$0xf]
      %v620 = vld [vmem:[%s4 + $0xc] sm:$0xf]
      %v621 = vld [vmem:[%s5] sm:$0xf]
      %v622 = vld [vmem:[%s5 + $0x4] sm:$0xf]
      %v623 = vld [vmem:[%s5 + $0x8] sm:$0xf]
      %v624 = vld [vmem:[%s5 + $0xc] sm:$0xf]
      %v625 = vmul.f32 %v610, %v320
      %v626 = vmul.f32 %v612, %v321
      %v627 = vmul.f32 %v614, %v322
      %v628 = vmul.f32 %v616, %v323
      %v629 = vpack.c.bf16 %v626, %v625
      %v630 = vpack.c.bf16 %v628, %v627
      %v635 = vunpack.c.l.b16 %v621
      %v636 = vunpack.c.l.b16 %v622
      %v637 = vunpack.c.l.b16 %v623
      %v638 = vunpack.c.l.b16 %v624
      %v639 = vpack.c.b16 %v636, %v635
      %v640 = vpack.c.b16 %v638, %v637
      %v642 = vsel %vm366, %v639, 0
      %v645 = vsel %vm366, %v640, 0
      %647 = vmatprep.subr.bf16.mxu0 0
      %648 = vmatpush1.bf16.msra.mxu0 %v629
      %649 = vmatprep.subr.bf16.mxu0 0
      %650 = vmatpush1.bf16.msra.mxu0 %v630
      %651 = vmatprep.subr.bf16.mxu0 0
      %652 = vmatpush1.bf16.msra.mxu0 0
      %653 = vmatprep.subr.bf16.mxu0 0
      %654 = vmatpush1.bf16.msra.mxu0 0
      %655 = vmatprep.subr.bf16.mxu0 0
      %656 = vmatpush1.bf16.msra.mxu0 0
      %657 = vmatprep.subr.bf16.mxu0 0
      %658 = vmatpush1.bf16.msra.mxu0 0
      %659 = vmatprep.subr.bf16.mxu0 0
      %660 = vmatpush1.bf16.msra.mxu0 0
      %661 = vmatprep.subr.bf16.mxu0 0
      %662 = vmatpush1.bf16.msra.mxu0 0
      %663 = vmatprep.subr.bf16.mxu0 0
      %664 = vmatpush1.bf16.msra.mxu0 0
      %665 = vmatprep.subr.bf16.mxu0 0
      %666 = vmatpush1.bf16.msra.mxu0 0
      %667 = vmatprep.subr.bf16.mxu0 0
      %668 = vmatpush1.bf16.msra.mxu0 0
      %669 = vmatprep.subr.bf16.mxu0 0
      %670 = vmatpush1.bf16.msra.mxu0 0
      %671 = vmatprep.subr.bf16.mxu0 0
      %672 = vmatpush1.bf16.msra.mxu0 0
      %673 = vmatprep.subr.bf16.mxu0 0
      %674 = vmatpush1.bf16.msra.mxu0 0
      %675 = vmatprep.subr.bf16.mxu0 0
      %676 = vmatpush1.bf16.msra.mxu0 0
      %677 = vmatprep.subr.bf16.mxu0 0
      %678 = vmatpush1.bf16.msra.mxu0 0
      %679 = vmatprep.mubr.bf16.mxu0 0
      %680 = vmatmul.mubr.bf16.gmra.mrb[0].mxu0 %v642
      %v681 = vpop.f32.mrb[0].mxu0
      %v682 = vadd.f32 0.0, %v681
      %v683 = vpop.f32.mrb[0].mxu0
      %v684 = vpop.f32.mrb[0].mxu0
      %v685 = vadd.f32 0.0, %v684
      %v686 = vpop.f32.mrb[0].mxu0
      %687 = vmatprep.mubr.bf16.mxu0 0
      %688 = vmatmul.mubr.bf16.gmra.mrb[0].mxu0 %v645
      %v689 = vpop.f32.mrb[0].mxu0
      %v690 = vadd.f32 0.0, %v689
      %v691 = vpop.f32.mrb[0].mxu0
      %v692 = vpop.f32.mrb[0].mxu0
      %v693 = vadd.f32 0.0, %v692
      %v694 = vpop.f32.mrb[0].mxu0
      %695 = vdwg.mxu0
      %v700 = vunpack.c.l.b16 %v617
      %v701 = vunpack.c.l.b16 %v618
      %v702 = vunpack.c.l.b16 %v619
      %v703 = vunpack.c.l.b16 %v620
      %v704 = vpack.c.b16 %v701, %v700
      %v705 = vpack.c.b16 %v703, %v702
      %v707 = vsel %vm366, %v704, 0
      %v710 = vsel %vm366, %v705, 0
      %712 = vmatprep.subr.bf16.mxu0 0
      %713 = vmatpush1.bf16.msra.mxu0 %v472
      %714 = vmatprep.subr.bf16.mxu0 0
      %715 = vmatpush1.bf16.msra.mxu0 %v473
      %716 = vmatprep.subr.bf16.mxu0 0
      %717 = vmatpush1.bf16.msra.mxu0 0
      %718 = vmatprep.subr.bf16.mxu0 0
      %719 = vmatpush1.bf16.msra.mxu0 0
      %720 = vmatprep.subr.bf16.mxu0 0
      %721 = vmatpush1.bf16.msra.mxu0 0
      %722 = vmatprep.subr.bf16.mxu0 0
      %723 = vmatpush1.bf16.msra.mxu0 0
      %724 = vmatprep.subr.bf16.mxu0 0
      %725 = vmatpush1.bf16.msra.mxu0 0
      %726 = vmatprep.subr.bf16.mxu0 0
      %727 = vmatpush1.bf16.msra.mxu0 0
      %728 = vmatprep.subr.bf16.mxu0 0
      %729 = vmatpush1.bf16.msra.mxu0 0
      %730 = vmatprep.subr.bf16.mxu0 0
      %731 = vmatpush1.bf16.msra.mxu0 0
      %732 = vmatprep.subr.bf16.mxu0 0
      %733 = vmatpush1.bf16.msra.mxu0 0
      %734 = vmatprep.subr.bf16.mxu0 0
      %735 = vmatpush1.bf16.msra.mxu0 0
      %736 = vmatprep.subr.bf16.mxu0 0
      %737 = vmatpush1.bf16.msra.mxu0 0
      %738 = vmatprep.subr.bf16.mxu0 0
      %739 = vmatpush1.bf16.msra.mxu0 0
      %740 = vmatprep.subr.bf16.mxu0 0
      %741 = vmatpush1.bf16.msra.mxu0 0
      %742 = vmatprep.subr.bf16.mxu0 0
      %743 = vmatpush1.bf16.msra.mxu0 0
      %744 = vmatprep.mubr.bf16.mxu0 0
      %745 = vmatmul.mubr.bf16.gmra.mrb[0].mxu0 %v707
      %v746 = vpop.f32.mrb[0].mxu0
      %v747 = vadd.f32 %v682, %v746
      %v748 = vpop.f32.mrb[0].mxu0
      %v749 = vpop.f32.mrb[0].mxu0
      %v750 = vadd.f32 %v685, %v749
      %v751 = vpop.f32.mrb[0].mxu0
      %752 = vmatprep.mubr.bf16.mxu0 0
      %753 = vmatmul.mubr.bf16.gmra.mrb[0].mxu0 %v710
      %v754 = vpop.f32.mrb[0].mxu0
      %v755 = vadd.f32 %v690, %v754
      %v756 = vpop.f32.mrb[0].mxu0
      %v757 = vpop.f32.mrb[0].mxu0
      %v758 = vadd.f32 %v693, %v757
      %v759 = vpop.f32.mrb[0].mxu0
      %760 = vdwg.mxu0
      %v761 = vld [vmem:[%s6] sm:$0xff]
      %v762 = vld [vmem:[%s6 + $0x8] sm:$0xff]
      %v763 = vld [vmem:[%s6 + $0x10] sm:$0xff]
      %v764 = vld [vmem:[%s6 + $0x18] sm:$0xff]
      %v765 = vadd.f32 %v747, %v761
      %v766 = vadd.f32 %v750, %v762
      %v767 = vadd.f32 %v755, %v763
      %v768 = vadd.f32 %v758, %v764
      %v769 = vtanh.pop %v765
      %v770 = vtanh.pop %v766
      %v771 = vtanh.pop %v767
      %v772 = vtanh.pop %v768
      %v773 = vsub.f32 1.0, %v602
      %v774 = vsub.f32 1.0, %v604
      %v775 = vsub.f32 1.0, %v606
      %v776 = vsub.f32 1.0, %v608
      %v777 = vmul.f32 %v773, %v320
      %v778 = vmul.f32 %v774, %v321
      %v779 = vmul.f32 %v775, %v322
      %v780 = vmul.f32 %v776, %v323
      %v781 = vmul.f32 %v602, %v769
      %v782 = vmul.f32 %v604, %v770
      %v783 = vmul.f32 %v606, %v771
      %v784 = vmul.f32 %v608, %v772
      %v785 = vadd.f32 %v777, %v781
      %v786 = vadd.f32 %v778, %v782
      %v787 = vadd.f32 %v779, %v783
      %v788 = vadd.f32 %v780, %v784
      %vm789 = vcmask 130048
      %790 = vst.msk [vmem:[#allocation2] sm:$0xff] %vm789, %v785
      %791 = vst.msk [vmem:[#allocation2 + $0x8] sm:$0xff] %vm789, %v786
      %792 = vst.msk [vmem:[#allocation2 + $0x10] sm:$0xff] %vm789, %v787
      %793 = vst.msk [vmem:[#allocation2 + $0x18] sm:$0xff] %vm789, %v788
      %v794 = vpack.c.bf16 %v786, %v785
      %v795 = vpack.c.bf16 %v788, %v787
      %v798 = vunpack.c.l.b16 %v794
      %v799 = vunpack.c.h.b16 %v794
      %v800 = vunpack.c.l.b16 %v795
      %v801 = vunpack.c.h.b16 %v795
      %v802 = vpack.c.b16 %v798, %v798
      %v803 = vpack.c.b16 %v799, %v799
      %v804 = vpack.c.b16 %v800, %v800
      %v805 = vpack.c.b16 %v801, %v801
      %vm810 = vcmask 125952
      %811 = vst.msk [vmem:[%s305] sm:$0xf] %vm810, %v802
      %812 = vst.msk [vmem:[%s305 + $0x4] sm:$0xf] %vm810, %v803
      %813 = vst.msk [vmem:[%s305 + $0x8] sm:$0xf] %vm810, %v804
      %814 = vst.msk [vmem:[%s305 + $0xc] sm:$0xf] %vm810, %v805
      %p815 = scmp.lt.s32.totalorder %s19, 2
      %s816 = scalar_select %p815, %s19, 2
      %s817 = smul.addr %s816, 4
      %s818 = smul.addr %s817, 4
      %s819 = scalar_lea.vmem %s8, %s818
      // Predicated region
      $region57: #{_grcu_core.2} parent=51 // pred_check
        %p820 = pneg %p210
      $region58: #{_grcu_core.2} parent=51 // pred_check_branch
        %822 = sbr.rel (%p820) target = $region60
      $region59: #{_grcu_core.2} parent=51 // pred_region
        _
      $region60: #{_grcu_core.2} parent=51 // pred_fallthru
        _
    $region52: #{_grcu_core.2} parent=5 // pred_fallthru
      _
    %p823 = scmp.le.s32.totalorder 2, %s14
    // Predicated region
    $region61: #{_grcu_core.2} parent=5 // pred_check
      %p824 = pneg %p823
    $region62: #{_grcu_core.2} parent=5 // pred_check_branch
      %826 = sbr.rel (%p824) target = $region64
    $region63: #{_grcu_core.2} parent=5 // pred_region
      %s827 = ssub.s32 %s14, 2
      // Predicated region
      $region65: #{_grcu_core.2} parent=63 // pred_check
        %p828 = pneg %p216
      $region66: #{_grcu_core.2} parent=63 // pred_check_branch
        %830 = sbr.rel (%p828) target = $region68
      $region67: #{_grcu_core.2} parent=63 // pred_region
        %p831 = scmp.lt.s32.totalorder %s20, 2
        %s832 = scalar_select %p831, %s20, 2
        %s833 = smul.addr %s832, 4
        %s834 = smul.addr %s833, 4
        %s835 = scalar_lea.vmem %s8, %s834
      $region68: #{_grcu_core.2} parent=63 // pred_fallthru
        _
    $region64: #{_grcu_core.2} parent=5 // pred_fallthru
      _
  $region6: #{_grcu_core.2} parent=0 // loop_footer
    %s18 = sadd.s32 1, %s14
  $region7: #{_grcu_core.2} parent=0 // loop_footer_branch
    %13 = sbr.rel target = $region3
  $region8: #{_grcu_core.2} parent=0 // loop_exit
    _

</llo_original>
